<compile_context>
chip_gen: v7x
topology: tpu7x:2x2x1
jax: 0.10.0
libtpu: 0.0.40
codegen_flags: <defaults>
</compile_context>

<pallas_src>
import jax
import jax.numpy as jnp
from jax import lax
from jax.experimental import pallas as pl
from jax.experimental.pallas import tpu as pltpu


def _round_up(a, b):
    return -(-a // b) * b


def _make_kernel(*, k, stride, Wp, n_tiles, T, C_out, inv_count,
                 instance_norm, relu, eps=1e-5):
    neg_slope = 0.2

    def kernel(x_ref, w_ref, p_ref, m_ref, o_ref):
        # x_ref: (1, C_in_p, L_in)  bf16   flattened reflection-padded image (+ zero tail)
        # w_ref: (k*k, C_out, C_in_p) bf16 per-tap weight slices
        # p_ref: (C_out, 3) f32            packed [bias, gamma, beta]
        # m_ref: (1, L_out) f32            1.0 at valid output positions, else 0.0
        # o_ref: (1, C_out, L_out) f32
        b = p_ref[:, 0:1]                     # (C_out, 1)
        g = p_ref[:, 1:2]
        bt = p_ref[:, 2:3]

        if instance_norm:
            run_sum = jnp.zeros((C_out, 1), jnp.float32)
            run_sq = jnp.zeros((C_out, 1), jnp.float32)

        # Pass 1: conv (+ bias) per spatial tile; accumulate masked IN statistics.
        for j in range(n_tiles):
            o_lo = j * T
            acc = jnp.zeros((C_out, T), jnp.float32)
            for kh in range(k):
                for kw in range(k):
                    d = kh * Wp + kw
                    start = stride * o_lo + d          # static Python int
                    if stride == 1:
                        xs = x_ref[0, :, start:start + T]              # (C_in_p, T)
                    else:
                        # TODO(synk): stride > 1 uses a strided lane load and
                        # over-computes by ~stride; not exercised by the test config.
                        xs = x_ref[0, :, pl.ds(start, T, stride=stride)]
                    acc = acc + jnp.dot(w_ref[kh * k + kw], xs,
                                        preferred_element_type=jnp.float32)
            y = acc + b                                                 # (C_out, T)
            if instance_norm:
                m = m_ref[:, o_lo:o_lo + T]                             # (1, T)
                ym = y * m
                run_sum = run_sum + jnp.sum(ym, axis=1, keepdims=True)
                run_sq = run_sq + jnp.sum(ym * y, axis=1, keepdims=True)
            elif relu:
                y = jnp.where(y > 0, y, neg_slope * y)
            o_ref[0, :, o_lo:o_lo + T] = y

        # Pass 2 (instance norm): normalize + affine + LeakyReLU, all in VMEM.
        if instance_norm:
            mean = run_sum * inv_count
            var = run_sq * inv_count - mean * mean                      # biased variance
            scale = g * lax.rsqrt(var + eps)
            shift = bt - mean * scale
            for j in range(n_tiles):
                o_lo = j * T
                y = o_ref[0, :, o_lo:o_lo + T] * scale + shift
                if relu:
                    y = jnp.where(y > 0, y, neg_slope * y)
                o_ref[0, :, o_lo:o_lo + T] = y

    return kernel


def conv_layer(x, weight, bias, gamma, beta, *, kernel_size, stride,
               relu=True, instance_norm=False, compute_dtype=jnp.bfloat16):
    """x: (N, C_in, H, W) NCHW float32; weight: (C_out, C_in, k, k) OIHW."""
    N, C_in, H, W = x.shape
    C_out = weight.shape[0]
    k = int(kernel_size)
    s = int(stride)
    pad = k // 2   # matches ReflectionPad2d(k//2) for odd k (as used by PyNet).

    # Reflection padding (cheap XLA glue — layout plumbing, not the hot path).
    xp = jnp.pad(x, ((0, 0), (0, 0), (pad, pad), (pad, pad)), mode="reflect")
    Hp, Wp = H + 2 * pad, W + 2 * pad
    H_out = (Hp - k) // s + 1
    W_out = (Wp - k) // s + 1

    # Pad C_in up to a multiple of 8 with zero channels (no effect on the result).
    C_in_p = _round_up(C_in, 8)
    w = weight
    if C_in_p != C_in:
        xp = jnp.pad(xp, ((0, 0), (0, C_in_p - C_in), (0, 0), (0, 0)))
        w = jnp.pad(w, ((0, 0), (0, C_in_p - C_in), (0, 0), (0, 0)))

    # "Over-computed" flat output: flat index i = h*Wp + w_col for h < H_out and all Wp
    # columns; only w_col < W_out is kept.  This keeps each (kh, kw) input window a
    # contiguous slice of the flattened padded image: input index = s*i + kh*Wp + kw.
    L_need = H_out * Wp
    T = _round_up(L_need, 128) if L_need <= 512 else 512
    n_tiles = -(-L_need // T)
    L_out = n_tiles * T
    # TODO(synk): for very large images, switch the static in-kernel tile loop to
    # lax.fori_loop / a grid axis to bound unrolled code size.

    d_max = (k - 1) * (Wp + 1)
    L_in = _round_up(s * (L_out - 1) + d_max + 1, 128)

    x_flat = xp.reshape(N, C_in_p, Hp * Wp)
    x_flat = jnp.pad(x_flat, ((0, 0), (0, 0), (0, L_in - Hp * Wp)))
    x_flat = x_flat.astype(compute_dtype)

    # Per-tap weight slices: (k*k, C_out, C_in_p), index kh*k + kw.
    w_taps = jnp.transpose(w, (2, 3, 0, 1)).reshape(k * k, C_out, C_in_p)
    w_taps = w_taps.astype(compute_dtype)

    # Packed affine/bias parameters: (C_out, 3) = [bias | gamma | beta].
    params = jnp.stack([bias, gamma, beta], axis=1).astype(jnp.float32)

    # Validity mask over the flat (over-computed) output positions.
    idx = jnp.arange(L_out, dtype=jnp.int32)
    valid = ((idx % Wp) < W_out) & ((idx // Wp) < H_out)
    mask = valid.astype(jnp.float32).reshape(1, L_out)

    kernel = _make_kernel(k=k, stride=s, Wp=Wp, n_tiles=n_tiles, T=T, C_out=C_out,
                          inv_count=1.0 / float(H_out * W_out),
                          instance_norm=instance_norm, relu=relu)

    esize = jnp.dtype(compute_dtype).itemsize
    block_bytes = (2 * (C_in_p * L_in * esize + C_out * L_out * 4)     # double-buffered
                   + k * k * C_out * C_in_p * esize + L_out * 4 + C_out * 3 * 4)
    vmem_limit = int(min(max(block_bytes + (8 << 20), 32 << 20), 48 << 20))

    out_flat = pl.pallas_call(
        kernel,
        out_shape=jax.ShapeDtypeStruct((N, C_out, L_out), jnp.float32),
        grid=(N,),
        in_specs=[
            pl.BlockSpec((1, C_in_p, L_in), lambda n: (n, 0, 0)),
            pl.BlockSpec((k * k, C_out, C_in_p), lambda n: (0, 0, 0)),
            pl.BlockSpec((C_out, 3), lambda n: (0, 0)),
            pl.BlockSpec((1, L_out), lambda n: (0, 0)),
        ],
        out_specs=pl.BlockSpec((1, C_out, L_out), lambda n: (n, 0, 0)),
        compiler_params=pltpu.CompilerParams(
            dimension_semantics=("parallel",),
            vmem_limit_bytes=vmem_limit,
        ),
    )(x_flat, w_taps, params, mask)

    # (N, C_out, L_out) -> crop valid region -> NCHW.  No transpose needed.
    out = out_flat[:, :, :H_out * Wp].reshape(N, C_out, H_out, Wp)[:, :, :, :W_out]
    return out


def _reference(x, weight, bias, gamma, beta, *, kernel_size, stride,
               relu=True, instance_norm=False, eps=1e-5):
    pad = kernel_size // 2
    xp = jnp.pad(x, ((0, 0), (0, 0), (pad, pad), (pad, pad)), mode="reflect")
    y = lax.conv_general_dilated(
        xp, weight, window_strides=(stride, stride), padding="VALID",
        dimension_numbers=("NCHW", "OIHW", "NCHW"))
    y = y + bias[None, :, None, None]
    if instance_norm:
        mean = jnp.mean(y, axis=(2, 3), keepdims=True)
        var = jnp.mean((y - mean) ** 2, axis=(2, 3), keepdims=True)
        y = (y - mean) * lax.rsqrt(var + eps)
        y = y * gamma[None, :, None, None] + beta[None, :, None, None]
    if relu:
        y = jnp.where(y > 0, y, 0.2 * y)
    return y


if __name__ == "__main__":
    # Module config (exercises every branch of ConvLayer.forward).
    N, C_in, H, W = 2, 4, 16, 16
    C_out, k, stride = 8, 3, 1
    relu, instance_norm = True, True

    key = jax.random.PRNGKey(0)
    kx, kw_, kb = jax.random.split(key, 3)
    x = jax.random.normal(kx, (N, C_in, H, W), dtype=jnp.float32)
    weight = 0.1 * jax.random.normal(kw_, (C_out, C_in, k, k), dtype=jnp.float32)
    bias = 0.1 * jax.random.normal(kb, (C_out,), dtype=jnp.float32)
    # InstanceNorm2d(affine=True) default init: weight=1, bias=0 (deterministic).
    gamma = jnp.ones((C_out,), dtype=jnp.float32)
    beta = jnp.zeros((C_out,), dtype=jnp.float32)

    out = conv_layer(x, weight, bias, gamma, beta,
                     kernel_size=k, stride=stride,
                     relu=relu, instance_norm=instance_norm)
    out = jax.block_until_ready(out)

    ref = _reference(x, weight, bias, gamma, beta,
                     kernel_size=k, stride=stride,
                     relu=relu, instance_norm=instance_norm)
    assert out.shape == (N, C_out, H, W), out.shape
    # bf16 matmul operands (f32 accumulation / f32 IN stats) -> loosened tolerance
    # versus the pure-f32 reference.
    err = float(jnp.max(jnp.abs(out - ref)))
    assert err < 5e-2, err

    print("KERNEL_OK")
</pallas_src>

<mosaic_0001>
module attributes {stable_mosaic.version = 11 : i64} {
  func.func @kernel(%arg0: i32, %arg1: memref<1x8x512xbf16, #tpu.memory_space<vmem>>, %arg2: memref<9x8x8xbf16, #tpu.memory_space<vmem>>, %arg3: memref<8x3xf32, #tpu.memory_space<vmem>>, %arg4: memref<1x384xf32, #tpu.memory_space<vmem>>, %arg5: memref<1x8x384xf32, #tpu.memory_space<vmem>>) attributes {dimension_semantics = [#tpu.dimension_semantics<parallel>], iteration_bounds = array<i64: 2>, scalar_prefetch = 0 : i64, scratch_operands = 0 : i64, tpu.core_type = #tpu.core_type<tc>, window_params = [{transform_indices = @transform_0, window_bounds = array<i64: 1, 8, 512>}, {pipeline_mode = #tpu.pipeline_mode<synchronous>, transform_indices = @transform_1, window_bounds = array<i64: 9, 8, 8>}, {pipeline_mode = #tpu.pipeline_mode<synchronous>, transform_indices = @transform_2, window_bounds = array<i64: 8, 3>}, {pipeline_mode = #tpu.pipeline_mode<synchronous>, transform_indices = @transform_3, window_bounds = array<i64: 1, 384>}, {transform_indices = @transform_4, window_bounds = array<i64: 1, 8, 384>}]} {
    %c0 = arith.constant 0 : index
    %c0_0 = arith.constant 0 : index
    %0 = vector.load %arg3[%c0, %c0_0] : memref<8x3xf32, #tpu.memory_space<vmem>>, vector<8x1xf32>
    %c0_1 = arith.constant 0 : index
    %c1 = arith.constant 1 : index
    %1 = vector.load %arg3[%c0_1, %c1] : memref<8x3xf32, #tpu.memory_space<vmem>>, vector<8x1xf32>
    %c0_2 = arith.constant 0 : index
    %c2 = arith.constant 2 : index
    %2 = vector.load %arg3[%c0_2, %c2] : memref<8x3xf32, #tpu.memory_space<vmem>>, vector<8x1xf32>
    %cst = arith.constant 0.000000e+00 : f32
    %3 = vector.broadcast %cst : f32 to vector<8x1xf32>
    %cst_3 = arith.constant 0.000000e+00 : f32
    %4 = vector.broadcast %cst_3 : f32 to vector<8x1xf32>
    %cst_4 = arith.constant 0.000000e+00 : f32
    %5 = vector.broadcast %cst_4 : f32 to vector<8x384xf32>
    %c0_5 = arith.constant 0 : index
    %c0_6 = arith.constant 0 : index
    %c0_7 = arith.constant 0 : index
    %6 = vector.load %arg1[%c0_5, %c0_6, %c0_7] : memref<1x8x512xbf16, #tpu.memory_space<vmem>>, vector<1x8x384xbf16>
    %7 = vector.shape_cast %6 : vector<1x8x384xbf16> to vector<8x384xbf16>
    %c0_8 = arith.constant 0 : index
    %c0_9 = arith.constant 0 : index
    %c0_10 = arith.constant 0 : index
    %8 = vector.load %arg2[%c0_8, %c0_9, %c0_10] : memref<9x8x8xbf16, #tpu.memory_space<vmem>>, vector<1x8x8xbf16>
    %9 = vector.shape_cast %8 : vector<1x8x8xbf16> to vector<8x8xbf16>
    %cst_11 = arith.constant dense<0.000000e+00> : vector<8x384xf32>
    %10 = tpu.matmul %9, %7, %cst_11 {dimension_numbers = #tpu.dot_dimension_numbers<[1], [0], [0], [1], [0, 0, 1, 1], [], []>} : vector<8x8xbf16>, vector<8x384xbf16>, vector<8x384xf32> -> vector<8x384xf32>
    %11 = arith.addf %5, %10 : vector<8x384xf32>
    %c0_12 = arith.constant 0 : index
    %c0_13 = arith.constant 0 : index
    %c1_14 = arith.constant 1 : index
    %12 = vector.load %arg1[%c0_12, %c0_13, %c1_14] : memref<1x8x512xbf16, #tpu.memory_space<vmem>>, vector<1x8x384xbf16>
    %13 = vector.shape_cast %12 : vector<1x8x384xbf16> to vector<8x384xbf16>
    %c1_15 = arith.constant 1 : index
    %c0_16 = arith.constant 0 : index
    %c0_17 = arith.constant 0 : index
    %14 = vector.load %arg2[%c1_15, %c0_16, %c0_17] : memref<9x8x8xbf16, #tpu.memory_space<vmem>>, vector<1x8x8xbf16>
    %15 = vector.shape_cast %14 : vector<1x8x8xbf16> to vector<8x8xbf16>
    %cst_18 = arith.constant dense<0.000000e+00> : vector<8x384xf32>
    %16 = tpu.matmul %15, %13, %cst_18 {dimension_numbers = #tpu.dot_dimension_numbers<[1], [0], [0], [1], [0, 0, 1, 1], [], []>} : vector<8x8xbf16>, vector<8x384xbf16>, vector<8x384xf32> -> vector<8x384xf32>
    %17 = arith.addf %11, %16 : vector<8x384xf32>
    %c0_19 = arith.constant 0 : index
    %c0_20 = arith.constant 0 : index
    %c2_21 = arith.constant 2 : index
    %18 = vector.load %arg1[%c0_19, %c0_20, %c2_21] : memref<1x8x512xbf16, #tpu.memory_space<vmem>>, vector<1x8x384xbf16>
    %19 = vector.shape_cast %18 : vector<1x8x384xbf16> to vector<8x384xbf16>
    %c2_22 = arith.constant 2 : index
    %c0_23 = arith.constant 0 : index
    %c0_24 = arith.constant 0 : index
    %20 = vector.load %arg2[%c2_22, %c0_23, %c0_24] : memref<9x8x8xbf16, #tpu.memory_space<vmem>>, vector<1x8x8xbf16>
    %21 = vector.shape_cast %20 : vector<1x8x8xbf16> to vector<8x8xbf16>
    %cst_25 = arith.constant dense<0.000000e+00> : vector<8x384xf32>
    %22 = tpu.matmul %21, %19, %cst_25 {dimension_numbers = #tpu.dot_dimension_numbers<[1], [0], [0], [1], [0, 0, 1, 1], [], []>} : vector<8x8xbf16>, vector<8x384xbf16>, vector<8x384xf32> -> vector<8x384xf32>
    %23 = arith.addf %17, %22 : vector<8x384xf32>
    %c0_26 = arith.constant 0 : index
    %c0_27 = arith.constant 0 : index
    %c18 = arith.constant 18 : index
    %24 = vector.load %arg1[%c0_26, %c0_27, %c18] : memref<1x8x512xbf16, #tpu.memory_space<vmem>>, vector<1x8x384xbf16>
    %25 = vector.shape_cast %24 : vector<1x8x384xbf16> to vector<8x384xbf16>
    %c3 = arith.constant 3 : index
    %c0_28 = arith.constant 0 : index
    %c0_29 = arith.constant 0 : index
    %26 = vector.load %arg2[%c3, %c0_28, %c0_29] : memref<9x8x8xbf16, #tpu.memory_space<vmem>>, vector<1x8x8xbf16>
    %27 = vector.shape_cast %26 : vector<1x8x8xbf16> to vector<8x8xbf16>
    %cst_30 = arith.constant dense<0.000000e+00> : vector<8x384xf32>
    %28 = tpu.matmul %27, %25, %cst_30 {dimension_numbers = #tpu.dot_dimension_numbers<[1], [0], [0], [1], [0, 0, 1, 1], [], []>} : vector<8x8xbf16>, vector<8x384xbf16>, vector<8x384xf32> -> vector<8x384xf32>
    %29 = arith.addf %23, %28 : vector<8x384xf32>
    %c0_31 = arith.constant 0 : index
    %c0_32 = arith.constant 0 : index
    %c19 = arith.constant 19 : index
    %30 = vector.load %arg1[%c0_31, %c0_32, %c19] : memref<1x8x512xbf16, #tpu.memory_space<vmem>>, vector<1x8x384xbf16>
    %31 = vector.shape_cast %30 : vector<1x8x384xbf16> to vector<8x384xbf16>
    %c4 = arith.constant 4 : index
    %c0_33 = arith.constant 0 : index
    %c0_34 = arith.constant 0 : index
    %32 = vector.load %arg2[%c4, %c0_33, %c0_34] : memref<9x8x8xbf16, #tpu.memory_space<vmem>>, vector<1x8x8xbf16>
    %33 = vector.shape_cast %32 : vector<1x8x8xbf16> to vector<8x8xbf16>
    %cst_35 = arith.constant dense<0.000000e+00> : vector<8x384xf32>
    %34 = tpu.matmul %33, %31, %cst_35 {dimension_numbers = #tpu.dot_dimension_numbers<[1], [0], [0], [1], [0, 0, 1, 1], [], []>} : vector<8x8xbf16>, vector<8x384xbf16>, vector<8x384xf32> -> vector<8x384xf32>
    %35 = arith.addf %29, %34 : vector<8x384xf32>
    %c0_36 = arith.constant 0 : index
    %c0_37 = arith.constant 0 : index
    %c20 = arith.constant 20 : index
    %36 = vector.load %arg1[%c0_36, %c0_37, %c20] : memref<1x8x512xbf16, #tpu.memory_space<vmem>>, vector<1x8x384xbf16>
    %37 = vector.shape_cast %36 : vector<1x8x384xbf16> to vector<8x384xbf16>
    %c5 = arith.constant 5 : index
    %c0_38 = arith.constant 0 : index
    %c0_39 = arith.constant 0 : index
    %38 = vector.load %arg2[%c5, %c0_38, %c0_39] : memref<9x8x8xbf16, #tpu.memory_space<vmem>>, vector<1x8x8xbf16>
    %39 = vector.shape_cast %38 : vector<1x8x8xbf16> to vector<8x8xbf16>
    %cst_40 = arith.constant dense<0.000000e+00> : vector<8x384xf32>
    %40 = tpu.matmul %39, %37, %cst_40 {dimension_numbers = #tpu.dot_dimension_numbers<[1], [0], [0], [1], [0, 0, 1, 1], [], []>} : vector<8x8xbf16>, vector<8x384xbf16>, vector<8x384xf32> -> vector<8x384xf32>
    %41 = arith.addf %35, %40 : vector<8x384xf32>
    %c0_41 = arith.constant 0 : index
    %c0_42 = arith.constant 0 : index
    %c36 = arith.constant 36 : index
    %42 = vector.load %arg1[%c0_41, %c0_42, %c36] : memref<1x8x512xbf16, #tpu.memory_space<vmem>>, vector<1x8x384xbf16>
    %43 = vector.shape_cast %42 : vector<1x8x384xbf16> to vector<8x384xbf16>
    %c6 = arith.constant 6 : index
    %c0_43 = arith.constant 0 : index
    %c0_44 = arith.constant 0 : index
    %44 = vector.load %arg2[%c6, %c0_43, %c0_44] : memref<9x8x8xbf16, #tpu.memory_space<vmem>>, vector<1x8x8xbf16>
    %45 = vector.shape_cast %44 : vector<1x8x8xbf16> to vector<8x8xbf16>
    %cst_45 = arith.constant dense<0.000000e+00> : vector<8x384xf32>
    %46 = tpu.matmul %45, %43, %cst_45 {dimension_numbers = #tpu.dot_dimension_numbers<[1], [0], [0], [1], [0, 0, 1, 1], [], []>} : vector<8x8xbf16>, vector<8x384xbf16>, vector<8x384xf32> -> vector<8x384xf32>
    %47 = arith.addf %41, %46 : vector<8x384xf32>
    %c0_46 = arith.constant 0 : index
    %c0_47 = arith.constant 0 : index
    %c37 = arith.constant 37 : index
    %48 = vector.load %arg1[%c0_46, %c0_47, %c37] : memref<1x8x512xbf16, #tpu.memory_space<vmem>>, vector<1x8x384xbf16>
    %49 = vector.shape_cast %48 : vector<1x8x384xbf16> to vector<8x384xbf16>
    %c7 = arith.constant 7 : index
    %c0_48 = arith.constant 0 : index
    %c0_49 = arith.constant 0 : index
    %50 = vector.load %arg2[%c7, %c0_48, %c0_49] : memref<9x8x8xbf16, #tpu.memory_space<vmem>>, vector<1x8x8xbf16>
    %51 = vector.shape_cast %50 : vector<1x8x8xbf16> to vector<8x8xbf16>
    %cst_50 = arith.constant dense<0.000000e+00> : vector<8x384xf32>
    %52 = tpu.matmul %51, %49, %cst_50 {dimension_numbers = #tpu.dot_dimension_numbers<[1], [0], [0], [1], [0, 0, 1, 1], [], []>} : vector<8x8xbf16>, vector<8x384xbf16>, vector<8x384xf32> -> vector<8x384xf32>
    %53 = arith.addf %47, %52 : vector<8x384xf32>
    %c0_51 = arith.constant 0 : index
    %c0_52 = arith.constant 0 : index
    %c38 = arith.constant 38 : index
    %54 = vector.load %arg1[%c0_51, %c0_52, %c38] : memref<1x8x512xbf16, #tpu.memory_space<vmem>>, vector<1x8x384xbf16>
    %55 = vector.shape_cast %54 : vector<1x8x384xbf16> to vector<8x384xbf16>
    %c8 = arith.constant 8 : index
    %c0_53 = arith.constant 0 : index
    %c0_54 = arith.constant 0 : index
    %56 = vector.load %arg2[%c8, %c0_53, %c0_54] : memref<9x8x8xbf16, #tpu.memory_space<vmem>>, vector<1x8x8xbf16>
    %57 = vector.shape_cast %56 : vector<1x8x8xbf16> to vector<8x8xbf16>
    %cst_55 = arith.constant dense<0.000000e+00> : vector<8x384xf32>
    %58 = tpu.matmul %57, %55, %cst_55 {dimension_numbers = #tpu.dot_dimension_numbers<[1], [0], [0], [1], [0, 0, 1, 1], [], []>} : vector<8x8xbf16>, vector<8x384xbf16>, vector<8x384xf32> -> vector<8x384xf32>
    %59 = arith.addf %53, %58 : vector<8x384xf32>
    %60 = vector.broadcast %0 : vector<8x1xf32> to vector<8x384xf32>
    %61 = arith.addf %59, %60 : vector<8x384xf32>
    %c0_56 = arith.constant 0 : index
    %c0_57 = arith.constant 0 : index
    %62 = vector.load %arg4[%c0_56, %c0_57] : memref<1x384xf32, #tpu.memory_space<vmem>>, vector<1x384xf32>
    %63 = vector.broadcast %62 : vector<1x384xf32> to vector<8x384xf32>
    %64 = arith.mulf %61, %63 : vector<8x384xf32>
    %cst_58 = arith.constant dense<0.000000e+00> : vector<8xf32>
    %65 = vector.multi_reduction <add>, %64, %cst_58 [1] : vector<8x384xf32> to vector<8xf32>
    %66 = vector.shape_cast %65 : vector<8xf32> to vector<8x1xf32>
    %67 = arith.addf %3, %66 : vector<8x1xf32>
    %68 = arith.mulf %64, %61 : vector<8x384xf32>
    %cst_59 = arith.constant dense<0.000000e+00> : vector<8xf32>
    %69 = vector.multi_reduction <add>, %68, %cst_59 [1] : vector<8x384xf32> to vector<8xf32>
    %70 = vector.shape_cast %69 : vector<8xf32> to vector<8x1xf32>
    %71 = arith.addf %4, %70 : vector<8x1xf32>
    %c0_60 = arith.constant 0 : index
    %c0_61 = arith.constant 0 : index
    %c0_62 = arith.constant 0 : index
    %72 = vector.load %arg5[%c0_60, %c0_61, %c0_62] : memref<1x8x384xf32, #tpu.memory_space<vmem>>, vector<1x8x384xf32>
    %73 = vector.shape_cast %72 : vector<1x8x384xf32> to vector<8x384xf32>
    %74 = vector.shape_cast %61 : vector<8x384xf32> to vector<1x8x384xf32>
    tpu.vector_store %arg5[%c0_60, %c0_61, %c0_62], %74 {strides = array<i32>} : memref<1x8x384xf32, #tpu.memory_space<vmem>>, vector<1x8x384xf32>,
    %cst_63 = arith.constant 3.906250e-03 : f32
    %75 = vector.broadcast %cst_63 : f32 to vector<8x1xf32>
    %76 = arith.mulf %67, %75 : vector<8x1xf32>
    %cst_64 = arith.constant 3.906250e-03 : f32
    %77 = vector.broadcast %cst_64 : f32 to vector<8x1xf32>
    %78 = arith.mulf %71, %77 : vector<8x1xf32>
    %79 = arith.mulf %76, %76 : vector<8x1xf32>
    %80 = arith.subf %78, %79 : vector<8x1xf32>
    %cst_65 = arith.constant 9.99999974E-6 : f32
    %81 = vector.broadcast %cst_65 : f32 to vector<8x1xf32>
    %82 = arith.addf %80, %81 : vector<8x1xf32>
    %83 = math.rsqrt %82 : vector<8x1xf32>
    %84 = arith.mulf %1, %83 : vector<8x1xf32>
    %85 = arith.mulf %76, %84 : vector<8x1xf32>
    %86 = arith.subf %2, %85 : vector<8x1xf32>
    %c0_66 = arith.constant 0 : index
    %c0_67 = arith.constant 0 : index
    %c0_68 = arith.constant 0 : index
    %87 = vector.load %arg5[%c0_66, %c0_67, %c0_68] : memref<1x8x384xf32, #tpu.memory_space<vmem>>, vector<1x8x384xf32>
    %88 = vector.shape_cast %87 : vector<1x8x384xf32> to vector<8x384xf32>
    %89 = vector.broadcast %84 : vector<8x1xf32> to vector<8x384xf32>
    %90 = arith.mulf %88, %89 : vector<8x384xf32>
    %91 = vector.broadcast %86 : vector<8x1xf32> to vector<8x384xf32>
    %92 = arith.addf %90, %91 : vector<8x384xf32>
    %cst_69 = arith.constant 0.000000e+00 : f32
    %93 = vector.broadcast %cst_69 : f32 to vector<8x384xf32>
    %94 = arith.cmpf ogt, %92, %93 : vector<8x384xf32>
    %cst_70 = arith.constant 2.000000e-01 : f32
    %95 = vector.broadcast %cst_70 : f32 to vector<8x384xf32>
    %96 = arith.mulf %95, %92 : vector<8x384xf32>
    %97 = arith.select %94, %92, %96 : vector<8x384xi1>, vector<8x384xf32>
    %c0_71 = arith.constant 0 : index
    %c0_72 = arith.constant 0 : index
    %c0_73 = arith.constant 0 : index
    %98 = vector.load %arg5[%c0_71, %c0_72, %c0_73] : memref<1x8x384xf32, #tpu.memory_space<vmem>>, vector<1x8x384xf32>
    %99 = vector.shape_cast %98 : vector<1x8x384xf32> to vector<8x384xf32>
    %100 = vector.shape_cast %97 : vector<8x384xf32> to vector<1x8x384xf32>
    tpu.vector_store %arg5[%c0_71, %c0_72, %c0_73], %100 {strides = array<i32>} : memref<1x8x384xf32, #tpu.memory_space<vmem>>, vector<1x8x384xf32>,
    return
  }
  func.func @transform_0(%arg0: i32) -> (i32, i32, i32) {
    %c0_i32 = arith.constant 0 : i32
    %c0_i32_0 = arith.constant 0 : i32
    %c0_i32_1 = arith.constant 0 : i32
    return %arg0, %c0_i32, %c0_i32_0 : i32, i32, i32
  }
  func.func @transform_1(%arg0: i32) -> (i32, i32, i32) {
    %c0_i32 = arith.constant 0 : i32
    %c0_i32_0 = arith.constant 0 : i32
    %c0_i32_1 = arith.constant 0 : i32
    %c0_i32_2 = arith.constant 0 : i32
    return %c0_i32, %c0_i32_0, %c0_i32_1 : i32, i32, i32
  }
  func.func @transform_2(%arg0: i32) -> (i32, i32) {
    %c0_i32 = arith.constant 0 : i32
    %c0_i32_0 = arith.constant 0 : i32
    %c0_i32_1 = arith.constant 0 : i32
    return %c0_i32, %c0_i32_0 : i32, i32
  }
  func.func @transform_3(%arg0: i32) -> (i32, i32) {
    %c0_i32 = arith.constant 0 : i32
    %c0_i32_0 = arith.constant 0 : i32
    %c0_i32_1 = arith.constant 0 : i32
    return %c0_i32, %c0_i32_0 : i32, i32
  }
  func.func @transform_4(%arg0: i32) -> (i32, i32, i32) {
    %c0_i32 = arith.constant 0 : i32
    %c0_i32_0 = arith.constant 0 : i32
    %c0_i32_1 = arith.constant 0 : i32
    return %arg0, %c0_i32, %c0_i32_0 : i32, i32, i32
  }
}

</mosaic_0001>

<llo_original>
// kernel: tpu_custom_call.1
$region0: #{tpu_custom_call.1}
  #allocation0 [shape = 'u32[]', space=smem, size = 0x4, offset = 0x4, fixed_abs, tag = 'smem constant byte address 0x4 - core index']
  #allocation1 [shape = 'u32[144,128]{1,0:T(1,128)}', space=vmem, size = 0x12000, scoped, tag = 'internal scratch']
  %s0 = inlined_call_operand.vmem [shape: bf16[2,8,512], index: 0, kind: input, shape index: {}]
  %s1 = inlined_call_operand.vmem [shape: bf16[9,8,8], index: 1, kind: input, shape index: {}]
  %s2 = inlined_call_operand.vmem [shape: f32[8,3], index: 2, kind: input, shape index: {}]
  %s3 = inlined_call_operand.vmem [shape: f32[1,384], index: 3, kind: input, shape index: {}]
  %s4 = inlined_call_operand.hbm [shape: f32[2,8,384], index: 4, kind: output, shape index: {}]
  %s5 = sld [smem:[#allocation0]]
  $region49: #{tpu_custom_call.1} parent=0
    _
  %s7 = ssub.s32 1, %s5
  %s8 = scalar_select 0, %s7, %s5
  $region1: #{tpu_custom_call.1} parent=0
    #allocation2 [shape = 'u8[24576]{0}', space=vmem, size = 0x6000, scoped, tag = 'output window, operand 0']
    #allocation3 [shape = 's32[2]{0}', space=sflag, size = 0x8, scoped, tag = 'scoped memory for tpu_custom_call.1']
    %9 = vsyncpa [#allocation3], 0
    %s10 = scalar_lea.sflag [#allocation3], 1
    %11 = vsyncpa %s10, 0
    loop: start=0, step=1, limit=4
    $region2: #{tpu_custom_call.1} parent=1 // loop_pre_header
      _
    $region3: #{tpu_custom_call.1} parent=1 // loop_header
      %s13 = sphi 0, %s17
      %p14 = scmp.ge.s32.totalorder %s13, 4
      %s23 = sphi 0, %s25
      %s26 = sphi 0, %s23
      %s27 = sphi 0, %s26
      %s43 = sphi 0, %s27
      %s47 = sphi 0, %s47
      %s49 = sphi 0, %s47
      %s50 = sphi 0, %s49
      %s64 = sphi 0, %s50
      %s68 = sphi 0, %s68
      %s70 = sphi 0, %s68
      %s71 = sphi 0, %s70
      %s85 = sphi 0, %s71
      %s89 = sphi 0, %s89
      %s91 = sphi 0, %s89
      %s92 = sphi 0, %s91
      %s106 = sphi 0, %s92
      %s112 = sphi 0, %s114
      %s115 = sphi 0, %s112
      %s116 = sphi 0, %s115
      %s132 = sphi 0, %s116
    $region4: #{tpu_custom_call.1} parent=1 // loop_header_branch
      %16 = sbr.rel (%p14) target = $region8
    $region5: #{tpu_custom_call.1} parent=1 // loop_body
      %s18 = ssub.s32 %s13, 1
      %s19 = ssub.s32 %s13, 2
      %s20 = sadd.s32 %s13, 1
      %s21 = ssub.s32 %s13, %s20
      %p22 = scmp.eq.s32.totalorder %s21, 0
      %s24 = sadd.s32 %s23, 1
      %s25 = scalar_select %p22, %s23, %s24
      %p28 = pneg %p22
      %p29 = scmp.eq.s32.totalorder %s13, 1
      %p30 = por %p28, %p29
      %p31 = scmp.ne.s32.totalorder %s23, %s26
      %p32 = scmp.eq.s32.totalorder %s13, 0
      %p33 = por %p31, %p32
      %p34 = scmp.ne.s32.totalorder %s23, %s26
      %p35 = scmp.eq.s32.totalorder %s18, 1
      %p36 = por %p34, %p35
      %p37 = scmp.ne.s32.totalorder %s26, %s27
      %p38 = scmp.eq.s32.totalorder %s18, 0
      %p39 = por %p37, %p38
      %p40 = scmp.ne.s32.totalorder %s26, %s27
      %p41 = scmp.eq.s32.totalorder %s19, 1
      %p42 = por %p40, %p41
      %p44 = scmp.ne.s32.totalorder %s27, %s43
      %p45 = scmp.eq.s32.totalorder %s19, 0
      %p46 = por %p44, %p45
      %s48 = sadd.s32 %s47, 1
      %p51 = scmp.eq.s32.totalorder %s13, 1
      %p52 = scmp.ne.s32.totalorder %s47, %s49
      %p53 = scmp.eq.s32.totalorder %s13, 0
      %p54 = por %p52, %p53
      %p55 = scmp.ne.s32.totalorder %s47, %s49
      %p56 = scmp.eq.s32.totalorder %s18, 1
      %p57 = por %p55, %p56
      %p58 = scmp.ne.s32.totalorder %s49, %s50
      %p59 = scmp.eq.s32.totalorder %s18, 0
      %p60 = por %p58, %p59
      %p61 = scmp.ne.s32.totalorder %s49, %s50
      %p62 = scmp.eq.s32.totalorder %s19, 1
      %p63 = por %p61, %p62
      %p65 = scmp.ne.s32.totalorder %s50, %s64
      %p66 = scmp.eq.s32.totalorder %s19, 0
      %p67 = por %p65, %p66
      %s69 = sadd.s32 %s68, 1
      %p72 = scmp.eq.s32.totalorder %s13, 1
      %p73 = scmp.ne.s32.totalorder %s68, %s70
      %p74 = scmp.eq.s32.totalorder %s13, 0
      %p75 = por %p73, %p74
      %p76 = scmp.ne.s32.totalorder %s68, %s70
      %p77 = scmp.eq.s32.totalorder %s18, 1
      %p78 = por %p76, %p77
      %p79 = scmp.ne.s32.totalorder %s70, %s71
      %p80 = scmp.eq.s32.totalorder %s18, 0
      %p81 = por %p79, %p80
      %p82 = scmp.ne.s32.totalorder %s70, %s71
      %p83 = scmp.eq.s32.totalorder %s19, 1
      %p84 = por %p82, %p83
      %p86 = scmp.ne.s32.totalorder %s71, %s85
      %p87 = scmp.eq.s32.totalorder %s19, 0
      %p88 = por %p86, %p87
      %s90 = sadd.s32 %s89, 1
      %p93 = scmp.eq.s32.totalorder %s13, 1
      %p94 = scmp.ne.s32.totalorder %s89, %s91
      %p95 = scmp.eq.s32.totalorder %s13, 0
      %p96 = por %p94, %p95
      %p97 = scmp.ne.s32.totalorder %s89, %s91
      %p98 = scmp.eq.s32.totalorder %s18, 1
      %p99 = por %p97, %p98
      %p100 = scmp.ne.s32.totalorder %s91, %s92
      %p101 = scmp.eq.s32.totalorder %s18, 0
      %p102 = por %p100, %p101
      %p103 = scmp.ne.s32.totalorder %s91, %s92
      %p104 = scmp.eq.s32.totalorder %s19, 1
      %p105 = por %p103, %p104
      %p107 = scmp.ne.s32.totalorder %s92, %s106
      %p108 = scmp.eq.s32.totalorder %s19, 0
      %p109 = por %p107, %p108
      %s110 = ssub.s32 %s13, %s20
      %p111 = scmp.eq.s32.totalorder %s110, 0
      %s113 = sadd.s32 %s112, 1
      %s114 = scalar_select %p111, %s112, %s113
      %p117 = pneg %p111
      %p118 = scmp.eq.s32.totalorder %s13, 1
      %p119 = por %p117, %p118
      %p120 = scmp.ne.s32.totalorder %s112, %s115
      %p121 = scmp.eq.s32.totalorder %s13, 0
      %p122 = por %p120, %p121
      %p123 = scmp.ne.s32.totalorder %s112, %s115
      %p124 = scmp.eq.s32.totalorder %s18, 1
      %p125 = por %p123, %p124
      %p126 = scmp.ne.s32.totalorder %s115, %s116
      %p127 = scmp.eq.s32.totalorder %s18, 0
      %p128 = por %p126, %p127
      %p129 = scmp.ne.s32.totalorder %s115, %s116
      %p130 = scmp.eq.s32.totalorder %s19, 1
      %p131 = por %p129, %p130
      %p133 = scmp.ne.s32.totalorder %s116, %s132
      %p134 = scmp.eq.s32.totalorder %s19, 0
      %p135 = por %p133, %p134
      %p136 = scmp.le.s32.totalorder 1, %s13
      %p137 = scmp.lt.s32.totalorder %s13, 3
      %p138 = pnand %p136, %p137
      %p139 = pneg %p138
      // Predicated region
      $region9: #{tpu_custom_call.1} parent=5 // pred_check
        _
      $region10: #{tpu_custom_call.1} parent=5 // pred_check_branch
        %141 = sbr.rel (%p138) target = $region12
      $region11: #{tpu_custom_call.1} parent=5 // pred_region
        %s142 = ssub.s32 %s13, 1
        // Predicated region
        $region13: #{tpu_custom_call.1} parent=11 // pred_check
          %p143 = pneg %p60
        $region14: #{tpu_custom_call.1} parent=11 // pred_check_branch
          %145 = sbr.rel (%p143) target = $region16
        $region15: #{tpu_custom_call.1} parent=11 // pred_region
          _
        $region16: #{tpu_custom_call.1} parent=11 // pred_fallthru
          _
        // Predicated region
        $region17: #{tpu_custom_call.1} parent=11 // pred_check
          %p146 = pneg %p81
        $region18: #{tpu_custom_call.1} parent=11 // pred_check_branch
          %148 = sbr.rel (%p146) target = $region20
        $region19: #{tpu_custom_call.1} parent=11 // pred_region
          _
        $region20: #{tpu_custom_call.1} parent=11 // pred_fallthru
          _
        // Predicated region
        $region21: #{tpu_custom_call.1} parent=11 // pred_check
          %p149 = pneg %p102
        $region22: #{tpu_custom_call.1} parent=11 // pred_check_branch
          %151 = sbr.rel (%p149) target = $region24
        $region23: #{tpu_custom_call.1} parent=11 // pred_region
          _
        $region24: #{tpu_custom_call.1} parent=11 // pred_fallthru
          _
      $region12: #{tpu_custom_call.1} parent=5 // pred_fallthru
        _
      %p152 = scmp.lt.s32.totalorder %s13, 2
      // Predicated region
      $region25: #{tpu_custom_call.1} parent=5 // pred_check
        %p153 = pneg %p152
      $region26: #{tpu_custom_call.1} parent=5 // pred_check_branch
        %155 = sbr.rel (%p153) target = $region28
      $region27: #{tpu_custom_call.1} parent=5 // pred_region
        // Predicated region
        $region29: #{tpu_custom_call.1} parent=27 // pred_check
          %p156 = pneg %p33
        $region30: #{tpu_custom_call.1} parent=27 // pred_check_branch
          %158 = sbr.rel (%p156) target = $region32
        $region31: #{tpu_custom_call.1} parent=27 // pred_region
          %p159 = scmp.lt.s32.totalorder %s13, 1
          %s160 = scalar_select %p159, %s13, 1
          %s161 = smul.addr %s160, 4
          %s162 = smul.addr %s161, 4
          %s163 = scalar_lea.vmem %s0, %s162
        $region32: #{tpu_custom_call.1} parent=27 // pred_fallthru
          _
      $region28: #{tpu_custom_call.1} parent=5 // pred_fallthru
        _
      %p164 = scmp.le.s32.totalorder 1, %s13
      %p165 = scmp.lt.s32.totalorder %s13, 3
      %p166 = pnand %p164, %p165
      %p167 = pneg %p166
      // Predicated region
      $region33: #{tpu_custom_call.1} parent=5 // pred_check
        _
      $region34: #{tpu_custom_call.1} parent=5 // pred_check_branch
        %169 = sbr.rel (%p166) target = $region36
      $region35: #{tpu_custom_call.1} parent=5 // pred_region
        %s170 = ssub.s32 %s13, 1
        %p171 = scmp.lt.s32.totalorder %s18, 1
        %s172 = scalar_select %p171, %s18, 1
        %s173 = smul.addr %s172, 4
        %s174 = smul.addr %s173, 4
        %s175 = scalar_lea.vmem %s0, %s174
        %p176 = pneg %p39
        %p177 = pneg %p36
        %p178 = pneg %p60
        %p179 = pneg %p57
        %p180 = pneg %p81
        %p181 = pneg %p78
        %p182 = pneg %p102
        %p183 = pneg %p99
        %p184 = pneg %p128
        %p185 = pneg %p125
        %s186 = sand.u32 %s115, 1
        %s187 = scalar_lea.sflag [#allocation3], %s186
        %s188 = sand.u32 %s115, 1
        %s189 = smul.addr %s188, 24
        %s190 = scalar_lea.vmem [#allocation2], %s189
        %p191 = scmp.lt.s32.totalorder %s18, 1
        %s192 = scalar_select %p191, %s18, 1
        %s193 = smul.addr %s192, 4
        %s194 = smul.addr %s193, 4
        %s195 = scalar_lea.vmem %s0, %s194
        %v197 = vld [vmem:[%s2] sm:$0xff]
        %v198 = vld [vmem:[%s195] sm:$0xff]
        %v199 = vld [vmem:[%s195 + $0x8] sm:$0xf]
        %v200 = vld [vmem:[%s1] sm:$0xf]
        %v201 = vld [vmem:[%s195] sm:$0xff]
        %v202 = vld [vmem:[%s195 + $0x8] sm:$0xff]
        %s203 = scalar_lea.vmem %s1, 4
        %v204 = vld [vmem:[%s203] sm:$0xf]
        %v207 = vunpack.c.l.b16 %v201
        %v208 = vunpack.c.h.b16 %v201
        %v209 = vunpack.c.l.b16 %v202
        %v210 = vunpack.c.h.b16 %v202
        %v211 = vpack.c.b16 %v207, %v207
        %v212 = vpack.c.b16 %v208, %v208
        %v213 = vpack.c.b16 %v209, %v209
        %v214 = vpack.c.b16 %v210, %v210
        %215 = vrot.lane.b32.xlu0 %v211, 127
        %v216 = vpop.permute.xlu0 %215
        %217 = vrot.lane.b32.xlu0 %v212, 127
        %v218 = vpop.permute.xlu0 %217
        %219 = vrot.lane.b32.xlu0 %v213, 127
        %v220 = vpop.permute.xlu0 %219
        %221 = vrot.lane.b32.xlu0 %v214, 127
        %v222 = vpop.permute.xlu0 %221
        %vm223 = vcmask 1039360
        %v224 = vsel %vm223, %v216, %v218
        %v225 = vsel %vm223, %v218, %v220
        %v226 = vsel %vm223, %v220, %v222
        %vm227 = vcmask 64512
        %v229 = vsel %vm227, %v204, 0
        %vm231 = vcmask 1043456
        %v233 = vsel %vm231, %v224, 0
        %v236 = vsel %vm231, %v225, 0
        %v239 = vsel %vm231, %v226, 0
        %241 = vmatprep.subr.bf16.mxu0 %v236
        %242 = vmatpush1.bf16.msra.mxu0 %v233
        %243 = vmatprep.subr.bf16.mxu0 0
        %244 = vmatpush1.bf16.msra.mxu0 0
        %245 = vmatprep.subr.bf16.mxu0 0
        %246 = vmatpush1.bf16.msra.mxu0 0
        %247 = vmatprep.subr.bf16.mxu0 0
        %248 = vmatpush1.bf16.msra.mxu0 0
        %249 = vmatprep.subr.bf16.mxu0 0
        %250 = vmatpush1.bf16.msra.mxu0 0
        %251 = vmatprep.subr.bf16.mxu0 0
        %252 = vmatpush1.bf16.msra.mxu0 0
        %253 = vmatprep.subr.bf16.mxu0 0
        %254 = vmatpush1.bf16.msra.mxu0 0
        %255 = vmatprep.subr.bf16.mxu0 0
        %256 = vmatpush1.bf16.msra.mxu0 0
        %257 = vmatprep.subr.bf16.mxu0 0
        %258 = vmatpush1.bf16.msra.mxu0 0
        %259 = vmatprep.subr.bf16.mxu0 0
        %260 = vmatpush1.bf16.msra.mxu0 0
        %261 = vmatprep.subr.bf16.mxu0 0
        %262 = vmatpush1.bf16.msra.mxu0 0
        %263 = vmatprep.subr.bf16.mxu0 0
        %264 = vmatpush1.bf16.msra.mxu0 0
        %265 = vmatprep.subr.bf16.mxu0 0
        %266 = vmatpush1.bf16.msra.mxu0 0
        %267 = vmatprep.subr.bf16.mxu0 0
        %268 = vmatpush1.bf16.msra.mxu0 0
        %269 = vmatprep.subr.bf16.mxu0 0
        %270 = vmatpush1.bf16.msra.mxu0 0
        %271 = vmatprep.subr.bf16.mxu0 0
        %272 = vmatpush1.bf16.msra.mxu0 0
        %273 = vmatprep.mubr.bf16.mxu0 0
        %274 = vmatmul.mubr.bf16.gmra.mrb[0].mxu0 %v229
        %v275 = vpop.f32.mrb[0].mxu0
        %v276 = vadd.f32 0.0, %v275
        %v277 = vpop.f32.mrb[0].mxu0
        %v278 = vadd.f32 0.0, %v277
        %v279 = vpop.f32.mrb[0].mxu0
        %v280 = vpop.f32.mrb[0].mxu0
        %281 = vdwg.mxu0
        %282 = vmatprep.subr.bf16.mxu0 0
        %283 = vmatpush1.bf16.msra.mxu0 %v239
        %284 = vmatprep.subr.bf16.mxu0 0
        %285 = vmatpush1.bf16.msra.mxu0 0
        %286 = vmatprep.subr.bf16.mxu0 0
        %287 = vmatpush1.bf16.msra.mxu0 0
        %288 = vmatprep.subr.bf16.mxu0 0
        %289 = vmatpush1.bf16.msra.mxu0 0
        %290 = vmatprep.subr.bf16.mxu0 0
        %291 = vmatpush1.bf16.msra.mxu0 0
        %292 = vmatprep.subr.bf16.mxu0 0
        %293 = vmatpush1.bf16.msra.mxu0 0
        %294 = vmatprep.subr.bf16.mxu0 0
        %295 = vmatpush1.bf16.msra.mxu0 0
        %296 = vmatprep.subr.bf16.mxu0 0
        %297 = vmatpush1.bf16.msra.mxu0 0
        %298 = vmatprep.subr.bf16.mxu0 0
        %299 = vmatpush1.bf16.msra.mxu0 0
        %300 = vmatprep.subr.bf16.mxu0 0
        %301 = vmatpush1.bf16.msra.mxu0 0
        %302 = vmatprep.subr.bf16.mxu0 0
        %303 = vmatpush1.bf16.msra.mxu0 0
        %304 = vmatprep.subr.bf16.mxu0 0
        %305 = vmatpush1.bf16.msra.mxu0 0
        %306 = vmatprep.subr.bf16.mxu0 0
        %307 = vmatpush1.bf16.msra.mxu0 0
        %308 = vmatprep.subr.bf16.mxu0 0
        %309 = vmatpush1.bf16.msra.mxu0 0
        %310 = vmatprep.subr.bf16.mxu0 0
        %311 = vmatpush1.bf16.msra.mxu0 0
        %312 = vmatprep.subr.bf16.mxu0 0
        %313 = vmatpush1.bf16.msra.mxu0 0
        %314 = vmatprep.mubr.bf16.mxu0 0
        %315 = vmatmul.mubr.bf16.gmra.mrb[0].mxu0 %v229
        %v316 = vpop.f32.mrb[0].mxu0
        %v317 = vadd.f32 0.0, %v316
        %v318 = vpop.f32.mrb[0].mxu0
        %v319 = vpop.f32.mrb[0].mxu0
        %v320 = vpop.f32.mrb[0].mxu0
        %321 = vdwg.mxu0
        %v324 = vunpack.c.l.b16 %v198
        %v325 = vunpack.c.h.b16 %v198
        %v326 = vunpack.c.l.b16 %v199
        %v327 = vpack.c.b16 %v324, %v324
        %v328 = vpack.c.b16 %v325, %v325
        %v329 = vpack.c.b16 %v326, %v326
        %v331 = vsel %vm227, %v200, 0
        %v334 = vsel %vm231, %v327, 0
        %v337 = vsel %vm231, %v328, 0
        %v340 = vsel %vm231, %v329, 0
        %342 = vmatprep.subr.bf16.mxu0 %v337
        %343 = vmatpush1.bf16.msra.mxu0 %v334
        %344 = vmatprep.subr.bf16.mxu0 0
        %345 = vmatpush1.bf16.msra.mxu0 0
        %346 = vmatprep.subr.bf16.mxu0 0
        %347 = vmatpush1.bf16.msra.mxu0 0
        %348 = vmatprep.subr.bf16.mxu0 0
        %349 = vmatpush1.bf16.msra.mxu0 0
        %350 = vmatprep.subr.bf16.mxu0 0
        %351 = vmatpush1.bf16.msra.mxu0 0
        %352 = vmatprep.subr.bf16.mxu0 0
        %353 = vmatpush1.bf16.msra.mxu0 0
        %354 = vmatprep.subr.bf16.mxu0 0
        %355 = vmatpush1.bf16.msra.mxu0 0
        %356 = vmatprep.subr.bf16.mxu0 0
        %357 = vmatpush1.bf16.msra.mxu0 0
        %358 = vmatprep.subr.bf16.mxu0 0
        %359 = vmatpush1.bf16.msra.mxu0 0
        %360 = vmatprep.subr.bf16.mxu0 0
        %361 = vmatpush1.bf16.msra.mxu0 0
        %362 = vmatprep.subr.bf16.mxu0 0
        %363 = vmatpush1.bf16.msra.mxu0 0
        %364 = vmatprep.subr.bf16.mxu0 0
        %365 = vmatpush1.bf16.msra.mxu0 0
        %366 = vmatprep.subr.bf16.mxu0 0
        %367 = vmatpush1.bf16.msra.mxu0 0
        %368 = vmatprep.subr.bf16.mxu0 0
        %369 = vmatpush1.bf16.msra.mxu0 0
        %370 = vmatprep.subr.bf16.mxu0 0
        %371 = vmatpush1.bf16.msra.mxu0 0
        %372 = vmatprep.subr.bf16.mxu0 0
        %373 = vmatpush1.bf16.msra.mxu0 0
        %374 = vmatprep.mubr.bf16.mxu0 0
        %375 = vmatmul.mubr.bf16.gmra.mrb[0].mxu0 %v331
        %v376 = vpop.f32.mrb[0].mxu0
        %v377 = vadd.f32 %v276, %v376
        %v378 = vpop.f32.mrb[0].mxu0
        %v379 = vadd.f32 %v278, %v378
        %v380 = vpop.f32.mrb[0].mxu0
        %v381 = vpop.f32.mrb[0].mxu0
        %382 = vdwg.mxu0
        %383 = vmatprep.subr.bf16.mxu0 0
        %384 = vmatpush1.bf16.msra.mxu0 %v340
        %385 = vmatprep.subr.bf16.mxu0 0
        %386 = vmatpush1.bf16.msra.mxu0 0
        %387 = vmatprep.subr.bf16.mxu0 0
        %388 = vmatpush1.bf16.msra.mxu0 0
        %389 = vmatprep.subr.bf16.mxu0 0
        %390 = vmatpush1.bf16.msra.mxu0 0
        %391 = vmatprep.subr.bf16.mxu0 0
        %392 = vmatpush1.bf16.msra.mxu0 0
        %393 = vmatprep.subr.bf16.mxu0 0
        %394 = vmatpush1.bf16.msra.mxu0 0
        %395 = vmatprep.subr.bf16.mxu0 0
        %396 = vmatpush1.bf16.msra.mxu0 0
        %397 = vmatprep.subr.bf16.mxu0 0
        %398 = vmatpush1.bf16.msra.mxu0 0
        %399 = vmatprep.subr.bf16.mxu0 0
        %400 = vmatpush1.bf16.msra.mxu0 0
        %401 = vmatprep.subr.bf16.mxu0 0
        %402 = vmatpush1.bf16.msra.mxu0 0
        %403 = vmatprep.subr.bf16.mxu0 0
        %404 = vmatpush1.bf16.msra.mxu0 0
        %405 = vmatprep.subr.bf16.mxu0 0
        %406 = vmatpush1.bf16.msra.mxu0 0
        %407 = vmatprep.subr.bf16.mxu0 0
        %408 = vmatpush1.bf16.msra.mxu0 0
        %409 = vmatprep.subr.bf16.mxu0 0
        %410 = vmatpush1.bf16.msra.mxu0 0
        %411 = vmatprep.subr.bf16.mxu0 0
        %412 = vmatpush1.bf16.msra.mxu0 0
        %413 = vmatprep.subr.bf16.mxu0 0
        %414 = vmatpush1.bf16.msra.mxu0 0
        %415 = vmatprep.mubr.bf16.mxu0 0
        %416 = vmatmul.mubr.bf16.gmra.mrb[0].mxu0 %v331
        %v417 = vpop.f32.mrb[0].mxu0
        %v418 = vadd.f32 %v317, %v417
        %v419 = vpop.f32.mrb[0].mxu0
        %v420 = vpop.f32.mrb[0].mxu0
        %v421 = vpop.f32.mrb[0].mxu0
        %422 = vdwg.mxu0
        %s423 = scalar_lea.vmem %s1, 8
        %v424 = vld [vmem:[%s423] sm:$0xf]
        %425 = vrot.lane.b32.xlu0 %v211, 126
        %v426 = vpop.permute.xlu0 %425
        %427 = vrot.lane.b32.xlu0 %v212, 126
        %v428 = vpop.permute.xlu0 %427
        %429 = vrot.lane.b32.xlu0 %v213, 126
        %v430 = vpop.permute.xlu0 %429
        %431 = vrot.lane.b32.xlu0 %v214, 126
        %v432 = vpop.permute.xlu0 %431
        %vm433 = vcmask 1031168
        %v434 = vsel %vm433, %v426, %v428
        %v435 = vsel %vm433, %v428, %v430
        %v436 = vsel %vm433, %v430, %v432
        %v438 = vsel %vm227, %v424, 0
        %v441 = vsel %vm231, %v434, 0
        %v444 = vsel %vm231, %v435, 0
        %v447 = vsel %vm231, %v436, 0
        %449 = vmatprep.subr.bf16.mxu0 %v444
        %450 = vmatpush1.bf16.msra.mxu0 %v441
        %451 = vmatprep.subr.bf16.mxu0 0
        %452 = vmatpush1.bf16.msra.mxu0 0
        %453 = vmatprep.subr.bf16.mxu0 0
        %454 = vmatpush1.bf16.msra.mxu0 0
        %455 = vmatprep.subr.bf16.mxu0 0
        %456 = vmatpush1.bf16.msra.mxu0 0
        %457 = vmatprep.subr.bf16.mxu0 0
        %458 = vmatpush1.bf16.msra.mxu0 0
        %459 = vmatprep.subr.bf16.mxu0 0
        %460 = vmatpush1.bf16.msra.mxu0 0
        %461 = vmatprep.subr.bf16.mxu0 0
        %462 = vmatpush1.bf16.msra.mxu0 0
        %463 = vmatprep.subr.bf16.mxu0 0
        %464 = vmatpush1.bf16.msra.mxu0 0
        %465 = vmatprep.subr.bf16.mxu0 0
        %466 = vmatpush1.bf16.msra.mxu0 0
        %467 = vmatprep.subr.bf16.mxu0 0
        %468 = vmatpush1.bf16.msra.mxu0 0
        %469 = vmatprep.subr.bf16.mxu0 0
        %470 = vmatpush1.bf16.msra.mxu0 0
        %471 = vmatprep.subr.bf16.mxu0 0
        %472 = vmatpush1.bf16.msra.mxu0 0
        %473 = vmatprep.subr.bf16.mxu0 0
        %474 = vmatpush1.bf16.msra.mxu0 0
        %475 = vmatprep.subr.bf16.mxu0 0
        %476 = vmatpush1.bf16.msra.mxu0 0
        %477 = vmatprep.subr.bf16.mxu0 0
        %478 = vmatpush1.bf16.msra.mxu0 0
        %479 = vmatprep.subr.bf16.mxu0 0
        %480 = vmatpush1.bf16.msra.mxu0 0
        %481 = vmatprep.mubr.bf16.mxu0 0
        %482 = vmatmul.mubr.bf16.gmra.mrb[0].mxu0 %v438
        %v483 = vpop.f32.mrb[0].mxu0
        %v484 = vadd.f32 0.0, %v483
        %v485 = vpop.f32.mrb[0].mxu0
        %v486 = vadd.f32 0.0, %v485
        %v487 = vpop.f32.mrb[0].mxu0
        %v488 = vpop.f32.mrb[0].mxu0
        %489 = vdwg.mxu0
        %490 = vmatprep.subr.bf16.mxu0 0
        %491 = vmatpush1.bf16.msra.mxu0 %v447
        %492 = vmatprep.subr.bf16.mxu0 0
        %493 = vmatpush1.bf16.msra.mxu0 0
        %494 = vmatprep.subr.bf16.mxu0 0
        %495 = vmatpush1.bf16.msra.mxu0 0
        %496 = vmatprep.subr.bf16.mxu0 0
        %497 = vmatpush1.bf16.msra.mxu0 0
        %498 = vmatprep.subr.bf16.mxu0 0
        %499 = vmatpush1.bf16.msra.mxu0 0
        %500 = vmatprep.subr.bf16.mxu0 0
        %501 = vmatpush1.bf16.msra.mxu0 0
        %502 = vmatprep.subr.bf16.mxu0 0
        %503 = vmatpush1.bf16.msra.mxu0 0
        %504 = vmatprep.subr.bf16.mxu0 0
        %505 = vmatpush1.bf16.msra.mxu0 0
        %506 = vmatprep.subr.bf16.mxu0 0
        %507 = vmatpush1.bf16.msra.mxu0 0
        %508 = vmatprep.subr.bf16.mxu0 0
        %509 = vmatpush1.bf16.msra.mxu0 0
        %510 = vmatprep.subr.bf16.mxu0 0
        %511 = vmatpush1.bf16.msra.mxu0 0
        %512 = vmatprep.subr.bf16.mxu0 0
        %513 = vmatpush1.bf16.msra.mxu0 0
        %514 = vmatprep.subr.bf16.mxu0 0
        %515 = vmatpush1.bf16.msra.mxu0 0
        %516 = vmatprep.subr.bf16.mxu0 0
        %517 = vmatpush1.bf16.msra.mxu0 0
        %518 = vmatprep.subr.bf16.mxu0 0
        %519 = vmatpush1.bf16.msra.mxu0 0
        %520 = vmatprep.subr.bf16.mxu0 0
        %521 = vmatpush1.bf16.msra.mxu0 0
        %522 = vmatprep.mubr.bf16.mxu0 0
        %523 = vmatmul.mubr.bf16.gmra.mrb[0].mxu0 %v438
        %v524 = vpop.f32.mrb[0].mxu0
        %v525 = vadd.f32 0.0, %v524
        %v526 = vpop.f32.mrb[0].mxu0
        %v527 = vpop.f32.mrb[0].mxu0
        %v528 = vpop.f32.mrb[0].mxu0
        %529 = vdwg.mxu0
        %v530 = vadd.f32 %v377, %v484
        %v531 = vadd.f32 %v379, %v486
        %v532 = vadd.f32 %v418, %v525
        %s533 = scalar_lea.vmem %s1, 12
        %v534 = vld [vmem:[%s533] sm:$0xf]
        %535 = vrot.lane.b32.xlu0 %v211, 110
        %v536 = vpop.permute.xlu0 %535
        %537 = vrot.lane.b32.xlu0 %v212, 110
        %v538 = vpop.permute.xlu0 %537
        %539 = vrot.lane.b32.xlu0 %v213, 110
        %v540 = vpop.permute.xlu0 %539
        %541 = vrot.lane.b32.xlu0 %v214, 110
        %v542 = vpop.permute.xlu0 %541
        %vm543 = vcmask 900096
        %v544 = vsel %vm543, %v536, %v538
        %v545 = vsel %vm543, %v538, %v540
        %v546 = vsel %vm543, %v540, %v542
        %v548 = vsel %vm227, %v534, 0
        %v551 = vsel %vm231, %v544, 0
        %v554 = vsel %vm231, %v545, 0
        %v557 = vsel %vm231, %v546, 0
        %559 = vmatprep.subr.bf16.mxu0 %v554
        %560 = vmatpush1.bf16.msra.mxu0 %v551
        %561 = vmatprep.subr.bf16.mxu0 0
        %562 = vmatpush1.bf16.msra.mxu0 0
        %563 = vmatprep.subr.bf16.mxu0 0
        %564 = vmatpush1.bf16.msra.mxu0 0
        %565 = vmatprep.subr.bf16.mxu0 0
        %566 = vmatpush1.bf16.msra.mxu0 0
        %567 = vmatprep.subr.bf16.mxu0 0
        %568 = vmatpush1.bf16.msra.mxu0 0
        %569 = vmatprep.subr.bf16.mxu0 0
        %570 = vmatpush1.bf16.msra.mxu0 0
        %571 = vmatprep.subr.bf16.mxu0 0
        %572 = vmatpush1.bf16.msra.mxu0 0
        %573 = vmatprep.subr.bf16.mxu0 0
        %574 = vmatpush1.bf16.msra.mxu0 0
        %575 = vmatprep.subr.bf16.mxu0 0
        %576 = vmatpush1.bf16.msra.mxu0 0
        %577 = vmatprep.subr.bf16.mxu0 0
        %578 = vmatpush1.bf16.msra.mxu0 0
        %579 = vmatprep.subr.bf16.mxu0 0
        %580 = vmatpush1.bf16.msra.mxu0 0
        %581 = vmatprep.subr.bf16.mxu0 0
        %582 = vmatpush1.bf16.msra.mxu0 0
        %583 = vmatprep.subr.bf16.mxu0 0
        %584 = vmatpush1.bf16.msra.mxu0 0
        %585 = vmatprep.subr.bf16.mxu0 0
        %586 = vmatpush1.bf16.msra.mxu0 0
        %587 = vmatprep.subr.bf16.mxu0 0
        %588 = vmatpush1.bf16.msra.mxu0 0
        %589 = vmatprep.subr.bf16.mxu0 0
        %590 = vmatpush1.bf16.msra.mxu0 0
        %591 = vmatprep.mubr.bf16.mxu0 0
        %592 = vmatmul.mubr.bf16.gmra.mrb[0].mxu0 %v548
        %v593 = vpop.f32.mrb[0].mxu0
        %v594 = vadd.f32 0.0, %v593
        %v595 = vpop.f32.mrb[0].mxu0
        %v596 = vadd.f32 0.0, %v595
        %v597 = vpop.f32.mrb[0].mxu0
        %v598 = vpop.f32.mrb[0].mxu0
        %599 = vdwg.mxu0
        %600 = vmatprep.subr.bf16.mxu0 0
        %601 = vmatpush1.bf16.msra.mxu0 %v557
        %602 = vmatprep.subr.bf16.mxu0 0
        %603 = vmatpush1.bf16.msra.mxu0 0
        %604 = vmatprep.subr.bf16.mxu0 0
        %605 = vmatpush1.bf16.msra.mxu0 0
        %606 = vmatprep.subr.bf16.mxu0 0
        %607 = vmatpush1.bf16.msra.mxu0 0
        %608 = vmatprep.subr.bf16.mxu0 0
        %609 = vmatpush1.bf16.msra.mxu0 0
        %610 = vmatprep.subr.bf16.mxu0 0
        %611 = vmatpush1.bf16.msra.mxu0 0
        %612 = vmatprep.subr.bf16.mxu0 0
        %613 = vmatpush1.bf16.msra.mxu0 0
        %614 = vmatprep.subr.bf16.mxu0 0
        %615 = vmatpush1.bf16.msra.mxu0 0
        %616 = vmatprep.subr.bf16.mxu0 0
        %617 = vmatpush1.bf16.msra.mxu0 0
        %618 = vmatprep.subr.bf16.mxu0 0
        %619 = vmatpush1.bf16.msra.mxu0 0
        %620 = vmatprep.subr.bf16.mxu0 0
        %621 = vmatpush1.bf16.msra.mxu0 0
        %622 = vmatprep.subr.bf16.mxu0 0
        %623 = vmatpush1.bf16.msra.mxu0 0
        %624 = vmatprep.subr.bf16.mxu0 0
        %625 = vmatpush1.bf16.msra.mxu0 0
        %626 = vmatprep.subr.bf16.mxu0 0
        %627 = vmatpush1.bf16.msra.mxu0 0
        %628 = vmatprep.subr.bf16.mxu0 0
        %629 = vmatpush1.bf16.msra.mxu0 0
        %630 = vmatprep.subr.bf16.mxu0 0
        %631 = vmatpush1.bf16.msra.mxu0 0
        %632 = vmatprep.mubr.bf16.mxu0 0
        %633 = vmatmul.mubr.bf16.gmra.mrb[0].mxu0 %v548
        %v634 = vpop.f32.mrb[0].mxu0
        %v635 = vadd.f32 0.0, %v634
        %v636 = vpop.f32.mrb[0].mxu0
        %v637 = vpop.f32.mrb[0].mxu0
        %v638 = vpop.f32.mrb[0].mxu0
        %639 = vdwg.mxu0
        %v640 = vadd.f32 %v530, %v594
        %v641 = vadd.f32 %v531, %v596
        %v642 = vadd.f32 %v532, %v635
        %s643 = scalar_lea.vmem %s1, 16
        %v644 = vld [vmem:[%s643] sm:$0xf]
        %645 = vrot.lane.b32.xlu0 %v211, 109
        %v646 = vpop.permute.xlu0 %645
        %647 = vrot.lane.b32.xlu0 %v212, 109
        %v648 = vpop.permute.xlu0 %647
        %649 = vrot.lane.b32.xlu0 %v213, 109
        %v650 = vpop.permute.xlu0 %649
        %651 = vrot.lane.b32.xlu0 %v214, 109
        %v652 = vpop.permute.xlu0 %651
        %vm653 = vcmask 891904
        %v654 = vsel %vm653, %v646, %v648
        %v655 = vsel %vm653, %v648, %v650
        %v656 = vsel %vm653, %v650, %v652
        %v658 = vsel %vm227, %v644, 0
        %v661 = vsel %vm231, %v654, 0
        %v664 = vsel %vm231, %v655, 0
        %v667 = vsel %vm231, %v656, 0
        %669 = vmatprep.subr.bf16.mxu0 %v664
        %670 = vmatpush1.bf16.msra.mxu0 %v661
        %671 = vmatprep.subr.bf16.mxu0 0
        %672 = vmatpush1.bf16.msra.mxu0 0
        %673 = vmatprep.subr.bf16.mxu0 0
        %674 = vmatpush1.bf16.msra.mxu0 0
        %675 = vmatprep.subr.bf16.mxu0 0
        %676 = vmatpush1.bf16.msra.mxu0 0
        %677 = vmatprep.subr.bf16.mxu0 0
        %678 = vmatpush1.bf16.msra.mxu0 0
        %679 = vmatprep.subr.bf16.mxu0 0
        %680 = vmatpush1.bf16.msra.mxu0 0
        %681 = vmatprep.subr.bf16.mxu0 0
        %682 = vmatpush1.bf16.msra.mxu0 0
        %683 = vmatprep.subr.bf16.mxu0 0
        %684 = vmatpush1.bf16.msra.mxu0 0
        %685 = vmatprep.subr.bf16.mxu0 0
        %686 = vmatpush1.bf16.msra.mxu0 0
        %687 = vmatprep.subr.bf16.mxu0 0
        %688 = vmatpush1.bf16.msra.mxu0 0
        %689 = vmatprep.subr.bf16.mxu0 0
        %690 = vmatpush1.bf16.msra.mxu0 0
        %691 = vmatprep.subr.bf16.mxu0 0
        %692 = vmatpush1.bf16.msra.mxu0 0
        %693 = vmatprep.subr.bf16.mxu0 0
        %694 = vmatpush1.bf16.msra.mxu0 0
        %695 = vmatprep.subr.bf16.mxu0 0
        %696 = vmatpush1.bf16.msra.mxu0 0
        %697 = vmatprep.subr.bf16.mxu0 0
        %698 = vmatpush1.bf16.msra.mxu0 0
        %699 = vmatprep.subr.bf16.mxu0 0
        %700 = vmatpush1.bf16.msra.mxu0 0
        %701 = vmatprep.mubr.bf16.mxu0 0
        %702 = vmatmul.mubr.bf16.gmra.mrb[0].mxu0 %v658
        %v703 = vpop.f32.mrb[0].mxu0
        %v704 = vadd.f32 0.0, %v703
        %v705 = vpop.f32.mrb[0].mxu0
        %v706 = vadd.f32 0.0, %v705
        %v707 = vpop.f32.mrb[0].mxu0
        %v708 = vpop.f32.mrb[0].mxu0
        %709 = vdwg.mxu0
        %710 = vmatprep.subr.bf16.mxu0 0
        %711 = vmatpush1.bf16.msra.mxu0 %v667
        %712 = vmatprep.subr.bf16.mxu0 0
        %713 = vmatpush1.bf16.msra.mxu0 0
        %714 = vmatprep.subr.bf16.mxu0 0
        %715 = vmatpush1.bf16.msra.mxu0 0
        %716 = vmatprep.subr.bf16.mxu0 0
        %717 = vmatpush1.bf16.msra.mxu0 0
        %718 = vmatprep.subr.bf16.mxu0 0
        %719 = vmatpush1.bf16.msra.mxu0 0
        %720 = vmatprep.subr.bf16.mxu0 0
        %721 = vmatpush1.bf16.msra.mxu0 0
        %722 = vmatprep.subr.bf16.mxu0 0
        %723 = vmatpush1.bf16.msra.mxu0 0
        %724 = vmatprep.subr.bf16.mxu0 0
        %725 = vmatpush1.bf16.msra.mxu0 0
        %726 = vmatprep.subr.bf16.mxu0 0
        %727 = vmatpush1.bf16.msra.mxu0 0
        %728 = vmatprep.subr.bf16.mxu0 0
        %729 = vmatpush1.bf16.msra.mxu0 0
        %730 = vmatprep.subr.bf16.mxu0 0
        %731 = vmatpush1.bf16.msra.mxu0 0
        %732 = vmatprep.subr.bf16.mxu0 0
        %733 = vmatpush1.bf16.msra.mxu0 0
        %734 = vmatprep.subr.bf16.mxu0 0
        %735 = vmatpush1.bf16.msra.mxu0 0
        %736 = vmatprep.subr.bf16.mxu0 0
        %737 = vmatpush1.bf16.msra.mxu0 0
        %738 = vmatprep.subr.bf16.mxu0 0
        %739 = vmatpush1.bf16.msra.mxu0 0
        %740 = vmatprep.subr.bf16.mxu0 0
        %741 = vmatpush1.bf16.msra.mxu0 0
        %742 = vmatprep.mubr.bf16.mxu0 0
        %743 = vmatmul.mubr.bf16.gmra.mrb[0].mxu0 %v658
        %v744 = vpop.f32.mrb[0].mxu0
        %v745 = vadd.f32 0.0, %v744
        %v746 = vpop.f32.mrb[0].mxu0
        %v747 = vpop.f32.mrb[0].mxu0
        %v748 = vpop.f32.mrb[0].mxu0
        %749 = vdwg.mxu0
        %v750 = vadd.f32 %v640, %v704
        %v751 = vadd.f32 %v641, %v706
        %v752 = vadd.f32 %v642, %v745
        %s753 = scalar_lea.vmem %s1, 20
        %v754 = vld [vmem:[%s753] sm:$0xf]
        %755 = vrot.lane.b32.xlu0 %v211, 108
        %v756 = vpop.permute.xlu0 %755
        %757 = vrot.lane.b32.xlu0 %v212, 108
        %v758 = vpop.permute.xlu0 %757
        %759 = vrot.lane.b32.xlu0 %v213, 108
        %v760 = vpop.permute.xlu0 %759
        %761 = vrot.lane.b32.xlu0 %v214, 108
        %v762 = vpop.permute.xlu0 %761
        %vm763 = vcmask 883712
        %v764 = vsel %vm763, %v756, %v758
        %v765 = vsel %vm763, %v758, %v760
        %v766 = vsel %vm763, %v760, %v762
        %v768 = vsel %vm227, %v754, 0
        %v771 = vsel %vm231, %v764, 0
        %v774 = vsel %vm231, %v765, 0
        %v777 = vsel %vm231, %v766, 0
        %779 = vmatprep.subr.bf16.mxu0 %v774
        %780 = vmatpush1.bf16.msra.mxu0 %v771
        %781 = vmatprep.subr.bf16.mxu0 0
        %782 = vmatpush1.bf16.msra.mxu0 0
        %783 = vmatprep.subr.bf16.mxu0 0
        %784 = vmatpush1.bf16.msra.mxu0 0
        %785 = vmatprep.subr.bf16.mxu0 0
        %786 = vmatpush1.bf16.msra.mxu0 0
        %787 = vmatprep.subr.bf16.mxu0 0
        %788 = vmatpush1.bf16.msra.mxu0 0
        %789 = vmatprep.subr.bf16.mxu0 0
        %790 = vmatpush1.bf16.msra.mxu0 0
        %791 = vmatprep.subr.bf16.mxu0 0
        %792 = vmatpush1.bf16.msra.mxu0 0
        %793 = vmatprep.subr.bf16.mxu0 0
        %794 = vmatpush1.bf16.msra.mxu0 0
        %795 = vmatprep.subr.bf16.mxu0 0
        %796 = vmatpush1.bf16.msra.mxu0 0
        %797 = vmatprep.subr.bf16.mxu0 0
        %798 = vmatpush1.bf16.msra.mxu0 0
        %799 = vmatprep.subr.bf16.mxu0 0
        %800 = vmatpush1.bf16.msra.mxu0 0
        %801 = vmatprep.subr.bf16.mxu0 0
        %802 = vmatpush1.bf16.msra.mxu0 0
        %803 = vmatprep.subr.bf16.mxu0 0
        %804 = vmatpush1.bf16.msra.mxu0 0
        %805 = vmatprep.subr.bf16.mxu0 0
        %806 = vmatpush1.bf16.msra.mxu0 0
        %807 = vmatprep.subr.bf16.mxu0 0
        %808 = vmatpush1.bf16.msra.mxu0 0
        %809 = vmatprep.subr.bf16.mxu0 0
        %810 = vmatpush1.bf16.msra.mxu0 0
        %811 = vmatprep.mubr.bf16.mxu0 0
        %812 = vmatmul.mubr.bf16.gmra.mrb[0].mxu0 %v768
        %v813 = vpop.f32.mrb[0].mxu0
        %v814 = vadd.f32 0.0, %v813
        %v815 = vpop.f32.mrb[0].mxu0
        %v816 = vadd.f32 0.0, %v815
        %v817 = vpop.f32.mrb[0].mxu0
        %v818 = vpop.f32.mrb[0].mxu0
        %819 = vdwg.mxu0
        %820 = vmatprep.subr.bf16.mxu0 0
        %821 = vmatpush1.bf16.msra.mxu0 %v777
        %822 = vmatprep.subr.bf16.mxu0 0
        %823 = vmatpush1.bf16.msra.mxu0 0
        %824 = vmatprep.subr.bf16.mxu0 0
        %825 = vmatpush1.bf16.msra.mxu0 0
        %826 = vmatprep.subr.bf16.mxu0 0
        %827 = vmatpush1.bf16.msra.mxu0 0
        %828 = vmatprep.subr.bf16.mxu0 0
        %829 = vmatpush1.bf16.msra.mxu0 0
        %830 = vmatprep.subr.bf16.mxu0 0
        %831 = vmatpush1.bf16.msra.mxu0 0
        %832 = vmatprep.subr.bf16.mxu0 0
        %833 = vmatpush1.bf16.msra.mxu0 0
        %834 = vmatprep.subr.bf16.mxu0 0
        %835 = vmatpush1.bf16.msra.mxu0 0
        %836 = vmatprep.subr.bf16.mxu0 0
        %837 = vmatpush1.bf16.msra.mxu0 0
        %838 = vmatprep.subr.bf16.mxu0 0
        %839 = vmatpush1.bf16.msra.mxu0 0
        %840 = vmatprep.subr.bf16.mxu0 0
        %841 = vmatpush1.bf16.msra.mxu0 0
        %842 = vmatprep.subr.bf16.mxu0 0
        %843 = vmatpush1.bf16.msra.mxu0 0
        %844 = vmatprep.subr.bf16.mxu0 0
        %845 = vmatpush1.bf16.msra.mxu0 0
        %846 = vmatprep.subr.bf16.mxu0 0
        %847 = vmatpush1.bf16.msra.mxu0 0
        %848 = vmatprep.subr.bf16.mxu0 0
        %849 = vmatpush1.bf16.msra.mxu0 0
        %850 = vmatprep.subr.bf16.mxu0 0
        %851 = vmatpush1.bf16.msra.mxu0 0
        %852 = vmatprep.mubr.bf16.mxu0 0
        %853 = vmatmul.mubr.bf16.gmra.mrb[0].mxu0 %v768
        %v854 = vpop.f32.mrb[0].mxu0
        %v855 = vadd.f32 0.0, %v854
        %v856 = vpop.f32.mrb[0].mxu0
        %v857 = vpop.f32.mrb[0].mxu0
        %v858 = vpop.f32.mrb[0].mxu0
        %859 = vdwg.mxu0
        %v860 = vadd.f32 %v750, %v814
        %v861 = vadd.f32 %v751, %v816
        %v862 = vadd.f32 %v752, %v855
        %s863 = scalar_lea.vmem %s1, 24
        %v864 = vld [vmem:[%s863] sm:$0xf]
        %865 = vrot.lane.b32.xlu0 %v211, 92
        %v866 = vpop.permute.xlu0 %865
        %867 = vrot.lane.b32.xlu0 %v212, 92
        %v868 = vpop.permute.xlu0 %867
        %869 = vrot.lane.b32.xlu0 %v213, 92
        %v870 = vpop.permute.xlu0 %869
        %871 = vrot.lane.b32.xlu0 %v214, 92
        %v872 = vpop.permute.xlu0 %871
        %vm873 = vcmask 752640
        %v874 = vsel %vm873, %v866, %v868
        %v875 = vsel %vm873, %v868, %v870
        %v876 = vsel %vm873, %v870, %v872
        %v878 = vsel %vm227, %v864, 0
        %v881 = vsel %vm231, %v874, 0
        %v884 = vsel %vm231, %v875, 0
        %v887 = vsel %vm231, %v876, 0
        %889 = vmatprep.subr.bf16.mxu0 %v884
        %890 = vmatpush1.bf16.msra.mxu0 %v881
        %891 = vmatprep.subr.bf16.mxu0 0
        %892 = vmatpush1.bf16.msra.mxu0 0
        %893 = vmatprep.subr.bf16.mxu0 0
        %894 = vmatpush1.bf16.msra.mxu0 0
        %895 = vmatprep.subr.bf16.mxu0 0
        %896 = vmatpush1.bf16.msra.mxu0 0
        %897 = vmatprep.subr.bf16.mxu0 0
        %898 = vmatpush1.bf16.msra.mxu0 0
        %899 = vmatprep.subr.bf16.mxu0 0
        %900 = vmatpush1.bf16.msra.mxu0 0
        %901 = vmatprep.subr.bf16.mxu0 0
        %902 = vmatpush1.bf16.msra.mxu0 0
        %903 = vmatprep.subr.bf16.mxu0 0
        %904 = vmatpush1.bf16.msra.mxu0 0
        %905 = vmatprep.subr.bf16.mxu0 0
        %906 = vmatpush1.bf16.msra.mxu0 0
        %907 = vmatprep.subr.bf16.mxu0 0
        %908 = vmatpush1.bf16.msra.mxu0 0
        %909 = vmatprep.subr.bf16.mxu0 0
        %910 = vmatpush1.bf16.msra.mxu0 0
        %911 = vmatprep.subr.bf16.mxu0 0
        %912 = vmatpush1.bf16.msra.mxu0 0
        %913 = vmatprep.subr.bf16.mxu0 0
        %914 = vmatpush1.bf16.msra.mxu0 0
        %915 = vmatprep.subr.bf16.mxu0 0
        %916 = vmatpush1.bf16.msra.mxu0 0
        %917 = vmatprep.subr.bf16.mxu0 0
        %918 = vmatpush1.bf16.msra.mxu0 0
        %919 = vmatprep.subr.bf16.mxu0 0
        %920 = vmatpush1.bf16.msra.mxu0 0
        %921 = vmatprep.mubr.bf16.mxu0 0
        %922 = vmatmul.mubr.bf16.gmra.mrb[0].mxu0 %v878
        %v923 = vpop.f32.mrb[0].mxu0
        %v924 = vadd.f32 0.0, %v923
        %v925 = vpop.f32.mrb[0].mxu0
        %v926 = vadd.f32 0.0, %v925
        %v927 = vpop.f32.mrb[0].mxu0
        %v928 = vpop.f32.mrb[0].mxu0
        %929 = vdwg.mxu0
        %930 = vmatprep.subr.bf16.mxu0 0
        %931 = vmatpush1.bf16.msra.mxu0 %v887
        %932 = vmatprep.subr.bf16.mxu0 0
        %933 = vmatpush1.bf16.msra.mxu0 0
        %934 = vmatprep.subr.bf16.mxu0 0
        %935 = vmatpush1.bf16.msra.mxu0 0
        %936 = vmatprep.subr.bf16.mxu0 0
        %937 = vmatpush1.bf16.msra.mxu0 0
        %938 = vmatprep.subr.bf16.mxu0 0
        %939 = vmatpush1.bf16.msra.mxu0 0
        %940 = vmatprep.subr.bf16.mxu0 0
        %941 = vmatpush1.bf16.msra.mxu0 0
        %942 = vmatprep.subr.bf16.mxu0 0
        %943 = vmatpush1.bf16.msra.mxu0 0
        %944 = vmatprep.subr.bf16.mxu0 0
        %945 = vmatpush1.bf16.msra.mxu0 0
        %946 = vmatprep.subr.bf16.mxu0 0
        %947 = vmatpush1.bf16.msra.mxu0 0
        %948 = vmatprep.subr.bf16.mxu0 0
        %949 = vmatpush1.bf16.msra.mxu0 0
        %950 = vmatprep.subr.bf16.mxu0 0
        %951 = vmatpush1.bf16.msra.mxu0 0
        %952 = vmatprep.subr.bf16.mxu0 0
        %953 = vmatpush1.bf16.msra.mxu0 0
        %954 = vmatprep.subr.bf16.mxu0 0
        %955 = vmatpush1.bf16.msra.mxu0 0
        %956 = vmatprep.subr.bf16.mxu0 0
        %957 = vmatpush1.bf16.msra.mxu0 0
        %958 = vmatprep.subr.bf16.mxu0 0
        %959 = vmatpush1.bf16.msra.mxu0 0
        %960 = vmatprep.subr.bf16.mxu0 0
        %961 = vmatpush1.bf16.msra.mxu0 0
        %962 = vmatprep.mubr.bf16.mxu0 0
        %963 = vmatmul.mubr.bf16.gmra.mrb[0].mxu0 %v878
        %v964 = vpop.f32.mrb[0].mxu0
        %v965 = vadd.f32 0.0, %v964
        %v966 = vpop.f32.mrb[0].mxu0
        %v967 = vpop.f32.mrb[0].mxu0
        %v968 = vpop.f32.mrb[0].mxu0
        %969 = vdwg.mxu0
        %v970 = vadd.f32 %v860, %v924
        %v971 = vadd.f32 %v861, %v926
        %v972 = vadd.f32 %v862, %v965
        %s973 = scalar_lea.vmem %s1, 28
        %v974 = vld [vmem:[%s973] sm:$0xf]
        %975 = vrot.lane.b32.xlu0 %v211, 91
        %v976 = vpop.permute.xlu0 %975
        %977 = vrot.lane.b32.xlu0 %v212, 91
        %v978 = vpop.permute.xlu0 %977
        %979 = vrot.lane.b32.xlu0 %v213, 91
        %v980 = vpop.permute.xlu0 %979
        %981 = vrot.lane.b32.xlu0 %v214, 91
        %v982 = vpop.permute.xlu0 %981
        %vm983 = vcmask 744448
        %v984 = vsel %vm983, %v976, %v978
        %v985 = vsel %vm983, %v978, %v980
        %v986 = vsel %vm983, %v980, %v982
        %v988 = vsel %vm227, %v974, 0
        %v991 = vsel %vm231, %v984, 0
        %v994 = vsel %vm231, %v985, 0
        %v997 = vsel %vm231, %v986, 0
        %999 = vmatprep.subr.bf16.mxu0 %v994
        %1000 = vmatpush1.bf16.msra.mxu0 %v991
        %1001 = vmatprep.subr.bf16.mxu0 0
        %1002 = vmatpush1.bf16.msra.mxu0 0
        %1003 = vmatprep.subr.bf16.mxu0 0
        %1004 = vmatpush1.bf16.msra.mxu0 0
        %1005 = vmatprep.subr.bf16.mxu0 0
        %1006 = vmatpush1.bf16.msra.mxu0 0
        %1007 = vmatprep.subr.bf16.mxu0 0
        %1008 = vmatpush1.bf16.msra.mxu0 0
        %1009 = vmatprep.subr.bf16.mxu0 0
        %1010 = vmatpush1.bf16.msra.mxu0 0
        %1011 = vmatprep.subr.bf16.mxu0 0
        %1012 = vmatpush1.bf16.msra.mxu0 0
        %1013 = vmatprep.subr.bf16.mxu0 0
        %1014 = vmatpush1.bf16.msra.mxu0 0
        %1015 = vmatprep.subr.bf16.mxu0 0
        %1016 = vmatpush1.bf16.msra.mxu0 0
        %1017 = vmatprep.subr.bf16.mxu0 0
        %1018 = vmatpush1.bf16.msra.mxu0 0
        %1019 = vmatprep.subr.bf16.mxu0 0
        %1020 = vmatpush1.bf16.msra.mxu0 0
        %1021 = vmatprep.subr.bf16.mxu0 0
        %1022 = vmatpush1.bf16.msra.mxu0 0
        %1023 = vmatprep.subr.bf16.mxu0 0
        %1024 = vmatpush1.bf16.msra.mxu0 0
        %1025 = vmatprep.subr.bf16.mxu0 0
        %1026 = vmatpush1.bf16.msra.mxu0 0
        %1027 = vmatprep.subr.bf16.mxu0 0
        %1028 = vmatpush1.bf16.msra.mxu0 0
        %1029 = vmatprep.subr.bf16.mxu0 0
        %1030 = vmatpush1.bf16.msra.mxu0 0
        %1031 = vmatprep.mubr.bf16.mxu0 0
        %1032 = vmatmul.mubr.bf16.gmra.mrb[0].mxu0 %v988
        %v1033 = vpop.f32.mrb[0].mxu0
        %v1034 = vadd.f32 0.0, %v1033
        %v1035 = vpop.f32.mrb[0].mxu0
        %v1036 = vadd.f32 0.0, %v1035
        %v1037 = vpop.f32.mrb[0].mxu0
        %v1038 = vpop.f32.mrb[0].mxu0
        %1039 = vdwg.mxu0
        %1040 = vmatprep.subr.bf16.mxu0 0
        %1041 = vmatpush1.bf16.msra.mxu0 %v997
        %1042 = vmatprep.subr.bf16.mxu0 0
        %1043 = vmatpush1.bf16.msra.mxu0 0
        %1044 = vmatprep.subr.bf16.mxu0 0
        %1045 = vmatpush1.bf16.msra.mxu0 0
        %1046 = vmatprep.subr.bf16.mxu0 0
        %1047 = vmatpush1.bf16.msra.mxu0 0
        %1048 = vmatprep.subr.bf16.mxu0 0
        %1049 = vmatpush1.bf16.msra.mxu0 0
        %1050 = vmatprep.subr.bf16.mxu0 0
        %1051 = vmatpush1.bf16.msra.mxu0 0
        %1052 = vmatprep.subr.bf16.mxu0 0
        %1053 = vmatpush1.bf16.msra.mxu0 0
        %1054 = vmatprep.subr.bf16.mxu0 0
        %1055 = vmatpush1.bf16.msra.mxu0 0
        %1056 = vmatprep.subr.bf16.mxu0 0
        %1057 = vmatpush1.bf16.msra.mxu0 0
        %1058 = vmatprep.subr.bf16.mxu0 0
        %1059 = vmatpush1.bf16.msra.mxu0 0
        %1060 = vmatprep.subr.bf16.mxu0 0
        %1061 = vmatpush1.bf16.msra.mxu0 0
        %1062 = vmatprep.subr.bf16.mxu0 0
        %1063 = vmatpush1.bf16.msra.mxu0 0
        %1064 = vmatprep.subr.bf16.mxu0 0
        %1065 = vmatpush1.bf16.msra.mxu0 0
        %1066 = vmatprep.subr.bf16.mxu0 0
        %1067 = vmatpush1.bf16.msra.mxu0 0
        %1068 = vmatprep.subr.bf16.mxu0 0
        %1069 = vmatpush1.bf16.msra.mxu0 0
        %1070 = vmatprep.subr.bf16.mxu0 0
        %1071 = vmatpush1.bf16.msra.mxu0 0
        %1072 = vmatprep.mubr.bf16.mxu0 0
        %1073 = vmatmul.mubr.bf16.gmra.mrb[0].mxu0 %v988
        %v1074 = vpop.f32.mrb[0].mxu0
        %v1075 = vadd.f32 0.0, %v1074
        %v1076 = vpop.f32.mrb[0].mxu0
        %v1077 = vpop.f32.mrb[0].mxu0
        %v1078 = vpop.f32.mrb[0].mxu0
        %1079 = vdwg.mxu0
        %v1080 = vadd.f32 %v970, %v1034
        %v1081 = vadd.f32 %v971, %v1036
        %v1082 = vadd.f32 %v972, %v1075
        %s1083 = scalar_lea.vmem %s1, 32
        %v1084 = vld [vmem:[%s1083] sm:$0xf]
        %1085 = vrot.lane.b32.xlu0 %v211, 90
        %v1086 = vpop.permute.xlu0 %1085
        %1087 = vrot.lane.b32.xlu0 %v212, 90
        %v1088 = vpop.permute.xlu0 %1087
        %1089 = vrot.lane.b32.xlu0 %v213, 90
        %v1090 = vpop.permute.xlu0 %1089
        %1091 = vrot.lane.b32.xlu0 %v214, 90
        %v1092 = vpop.permute.xlu0 %1091
        %vm1093 = vcmask 736256
        %v1094 = vsel %vm1093, %v1086, %v1088
        %v1095 = vsel %vm1093, %v1088, %v1090
        %v1096 = vsel %vm1093, %v1090, %v1092
        %v1098 = vsel %vm227, %v1084, 0
        %v1101 = vsel %vm231, %v1094, 0
        %v1104 = vsel %vm231, %v1095, 0
        %v1107 = vsel %vm231, %v1096, 0
        %1109 = vmatprep.subr.bf16.mxu0 %v1104
        %1110 = vmatpush1.bf16.msra.mxu0 %v1101
        %1111 = vmatprep.subr.bf16.mxu0 0
        %1112 = vmatpush1.bf16.msra.mxu0 0
        %1113 = vmatprep.subr.bf16.mxu0 0
        %1114 = vmatpush1.bf16.msra.mxu0 0
        %1115 = vmatprep.subr.bf16.mxu0 0
        %1116 = vmatpush1.bf16.msra.mxu0 0
        %1117 = vmatprep.subr.bf16.mxu0 0
        %1118 = vmatpush1.bf16.msra.mxu0 0
        %1119 = vmatprep.subr.bf16.mxu0 0
        %1120 = vmatpush1.bf16.msra.mxu0 0
        %1121 = vmatprep.subr.bf16.mxu0 0
        %1122 = vmatpush1.bf16.msra.mxu0 0
        %1123 = vmatprep.subr.bf16.mxu0 0
        %1124 = vmatpush1.bf16.msra.mxu0 0
        %1125 = vmatprep.subr.bf16.mxu0 0
        %1126 = vmatpush1.bf16.msra.mxu0 0
        %1127 = vmatprep.subr.bf16.mxu0 0
        %1128 = vmatpush1.bf16.msra.mxu0 0
        %1129 = vmatprep.subr.bf16.mxu0 0
        %1130 = vmatpush1.bf16.msra.mxu0 0
        %1131 = vmatprep.subr.bf16.mxu0 0
        %1132 = vmatpush1.bf16.msra.mxu0 0
        %1133 = vmatprep.subr.bf16.mxu0 0
        %1134 = vmatpush1.bf16.msra.mxu0 0
        %1135 = vmatprep.subr.bf16.mxu0 0
        %1136 = vmatpush1.bf16.msra.mxu0 0
        %1137 = vmatprep.subr.bf16.mxu0 0
        %1138 = vmatpush1.bf16.msra.mxu0 0
        %1139 = vmatprep.subr.bf16.mxu0 0
        %1140 = vmatpush1.bf16.msra.mxu0 0
        %1141 = vmatprep.mubr.bf16.mxu0 0
        %1142 = vmatmul.mubr.bf16.gmra.mrb[0].mxu0 %v1098
        %v1143 = vpop.f32.mrb[0].mxu0
        %v1144 = vadd.f32 0.0, %v1143
        %v1145 = vpop.f32.mrb[0].mxu0
        %v1146 = vadd.f32 0.0, %v1145
        %v1147 = vpop.f32.mrb[0].mxu0
        %v1148 = vpop.f32.mrb[0].mxu0
        %1149 = vdwg.mxu0
        %1150 = vmatprep.subr.bf16.mxu0 0
        %1151 = vmatpush1.bf16.msra.mxu0 %v1107
        %1152 = vmatprep.subr.bf16.mxu0 0
        %1153 = vmatpush1.bf16.msra.mxu0 0
        %1154 = vmatprep.subr.bf16.mxu0 0
        %1155 = vmatpush1.bf16.msra.mxu0 0
        %1156 = vmatprep.subr.bf16.mxu0 0
        %1157 = vmatpush1.bf16.msra.mxu0 0
        %1158 = vmatprep.subr.bf16.mxu0 0
        %1159 = vmatpush1.bf16.msra.mxu0 0
        %1160 = vmatprep.subr.bf16.mxu0 0
        %1161 = vmatpush1.bf16.msra.mxu0 0
        %1162 = vmatprep.subr.bf16.mxu0 0
        %1163 = vmatpush1.bf16.msra.mxu0 0
        %1164 = vmatprep.subr.bf16.mxu0 0
        %1165 = vmatpush1.bf16.msra.mxu0 0
        %1166 = vmatprep.subr.bf16.mxu0 0
        %1167 = vmatpush1.bf16.msra.mxu0 0
        %1168 = vmatprep.subr.bf16.mxu0 0
        %1169 = vmatpush1.bf16.msra.mxu0 0
        %1170 = vmatprep.subr.bf16.mxu0 0
        %1171 = vmatpush1.bf16.msra.mxu0 0
        %1172 = vmatprep.subr.bf16.mxu0 0
        %1173 = vmatpush1.bf16.msra.mxu0 0
        %1174 = vmatprep.subr.bf16.mxu0 0
        %1175 = vmatpush1.bf16.msra.mxu0 0
        %1176 = vmatprep.subr.bf16.mxu0 0
        %1177 = vmatpush1.bf16.msra.mxu0 0
        %1178 = vmatprep.subr.bf16.mxu0 0
        %1179 = vmatpush1.bf16.msra.mxu0 0
        %1180 = vmatprep.subr.bf16.mxu0 0
        %1181 = vmatpush1.bf16.msra.mxu0 0
        %1182 = vmatprep.mubr.bf16.mxu0 0
        %1183 = vmatmul.mubr.bf16.gmra.mrb[0].mxu0 %v1098
        %v1184 = vpop.f32.mrb[0].mxu0
        %v1185 = vadd.f32 0.0, %v1184
        %v1186 = vpop.f32.mrb[0].mxu0
        %v1187 = vpop.f32.mrb[0].mxu0
        %v1188 = vpop.f32.mrb[0].mxu0
        %1189 = vdwg.mxu0
        %v1190 = vadd.f32 %v1080, %v1144
        %v1191 = vadd.f32 %v1081, %v1146
        %v1192 = vadd.f32 %v1082, %v1185
        %1194 = vset.pattern.permute.xlu0 0
        %1195 = vperm.xlu0 %1194, %v197
        %v1196 = vpop.permute.xlu0 %1195
        %v1198 = vadd.f32 %v1190, %v1196
        %v1199 = vadd.f32 %v1191, %v1196
        %v1200 = vadd.f32 %v1192, %v1196
        %v1201 = vld [vmem:[%s3] sm:$0x7]
        %v1203 = vlaneseq
        %v1204 = vshrl.u32 %v1203, 7
        %v1205 = vsub.s32 0, %v1204
        %v1206 = vrot.slane %v1201, %v1205
        %v1207 = vlaneseq
        %v1208 = vshrl.u32 %v1207, 7
        %v1209 = vsub.s32 1, %v1208
        %v1210 = vrot.slane %v1201, %v1209
        %v1211 = vlaneseq
        %v1212 = vshrl.u32 %v1211, 7
        %v1213 = vsub.s32 2, %v1212
        %v1214 = vrot.slane %v1201, %v1213
        %v1218 = vmul.f32 %v1198, %v1206
        %v1219 = vmul.f32 %v1199, %v1210
        %v1220 = vmul.f32 %v1200, %v1214
        %v1221 = vadd.f32 %v1218, %v1219
        %v1222 = vadd.f32 %v1221, %v1220
        %1223 = vadd.xlane.f32.xlu0 %v1222
        %v1224 = vpop.xlane.xlu0 %1223
        %v1225 = vadd.f32 %v1224, 0.0
        %v1226 = vmul.f32 %v1218, %v1198
        %v1227 = vmul.f32 %v1219, %v1199
        %v1228 = vmul.f32 %v1220, %v1200
        %v1229 = vadd.f32 %v1226, %v1227
        %v1230 = vadd.f32 %v1229, %v1228
        %1231 = vadd.xlane.f32.xlu0 %v1230
        %v1232 = vpop.xlane.xlu0 %1231
        %v1233 = vadd.f32 %v1232, 0.0
        %1234 = vst [vmem:[%s190] sm:$0xff] %v1198
        %1235 = vst [vmem:[%s190 + $0x8] sm:$0xff] %v1199
        %1236 = vst [vmem:[%s190 + $0x10] sm:$0xff] %v1200
        %v1237 = vmul.f32 %v1225, 0.00390625
        %v1238 = vmul.f32 %v1233, 0.00390625
        %v1239 = vmul.f32 %v1237, %v1237
        %v1240 = vsub.f32 %v1238, %v1239
        %v1241 = vadd.f32 %v1240, 1e-05
        %v1242 = vrsqrt.pop %v1241
        %v1243 = vmul.f32 %v197, %v1242
        %v1244 = vmul.f32 %v1237, %v1243
        %1246 = vrot.lane.b32.xlu0 %v1244, 1
        %v1247 = vpop.permute.xlu0 %1246
        %v1249 = vsub.f32 %v197, %v1247
        %v1250 = vld [vmem:[%s190] sm:$0xff]
        %v1251 = vld [vmem:[%s190 + $0x8] sm:$0xff]
        %v1252 = vld [vmem:[%s190 + $0x10] sm:$0xff]
        %1254 = vset.pattern.permute.xlu0 1
        %1255 = vperm.xlu0 %1254, %v1243
        %v1256 = vpop.permute.xlu0 %1255
        %v1258 = vmul.f32 %v1250, %v1256
        %v1259 = vmul.f32 %v1251, %v1256
        %v1260 = vmul.f32 %v1252, %v1256
        %1262 = vset.pattern.permute.xlu0 2
        %1263 = vperm.xlu0 %1262, %v1249
        %v1264 = vpop.permute.xlu0 %1263
        %v1266 = vadd.f32 %v1258, %v1264
        %v1267 = vadd.f32 %v1259, %v1264
        %v1268 = vadd.f32 %v1260, %v1264
        %vm1269 = vcmp.gt.f32.partialorder %v1266, 0.0
        %vm1270 = vcmp.gt.f32.partialorder %v1267, 0.0
        %vm1271 = vcmp.gt.f32.partialorder %v1268, 0.0
        %v1272 = vmul.f32 %v1266, 0.2
        %v1273 = vmul.f32 %v1267, 0.2
        %v1274 = vmul.f32 %v1268, 0.2
        %v1275 = vsel %vm1269, %v1266, %v1272
        %v1276 = vsel %vm1270, %v1267, %v1273
        %v1277 = vsel %vm1271, %v1268, %v1274
        %1278 = vst [vmem:[%s190] sm:$0xff] %v1275
        %1279 = vst [vmem:[%s190 + $0x8] sm:$0xff] %v1276
        %1280 = vst [vmem:[%s190 + $0x10] sm:$0xff] %v1277
        %s1281 = sand.u32 %s115, 1
        %s1282 = scalar_lea.sflag [#allocation3], %s1281
        %s1283 = sand.u32 %s115, 1
        %s1284 = smul.addr %s1283, 24
        %s1285 = scalar_lea.vmem [#allocation2], %s1284
        // Predicated region
        $region37: #{tpu_custom_call.1} parent=35 // pred_check
          %p1286 = pneg %p125
        $region38: #{tpu_custom_call.1} parent=35 // pred_check_branch
          %1288 = sbr.rel (%p1286) target = $region40
        $region39: #{tpu_custom_call.1} parent=35 // pred_region
          %s1290 = ssub.s32 384, 384
          %1291 = vsyncadd %s1282, %s1290
          %s1292 = smul.addr %s18, 3
          %s1293 = smul.addr %s1292, 128
          %s1294 = scalar_lea.hbm %s4, %s1293
          %s1296 = sshll.u32 %s1285, 4
          %s1297 = int_to_ptr.vmem [resolvable:$true] %s1296
          %1299 = dma.vmem_to_hbm [thread:$0]  %s1297, 384, %s1294, %s1282
        $region40: #{tpu_custom_call.1} parent=35 // pred_fallthru
          _
      $region36: #{tpu_custom_call.1} parent=5 // pred_fallthru
        _
      %p1300 = scmp.le.s32.totalorder 2, %s13
      // Predicated region
      $region41: #{tpu_custom_call.1} parent=5 // pred_check
        %p1301 = pneg %p1300
      $region42: #{tpu_custom_call.1} parent=5 // pred_check_branch
        %1303 = sbr.rel (%p1301) target = $region44
      $region43: #{tpu_custom_call.1} parent=5 // pred_region
        %s1304 = ssub.s32 %s13, 2
        // Predicated region
        $region45: #{tpu_custom_call.1} parent=43 // pred_check
          %p1305 = pneg %p131
        $region46: #{tpu_custom_call.1} parent=43 // pred_check_branch
          %1307 = sbr.rel (%p1305) target = $region48
        $region47: #{tpu_custom_call.1} parent=43 // pred_region
          %s1308 = sand.u32 %s116, 1
          %s1309 = scalar_lea.sflag [#allocation3], %s1308
          %s1310 = sand.u32 %s116, 1
          %s1311 = smul.addr %s1310, 24
          %s1312 = scalar_lea.vmem [#allocation2], %s1311
          %1313 = dma.done %s1309, 384
        $region48: #{tpu_custom_call.1} parent=43 // pred_fallthru
          _
      $region44: #{tpu_custom_call.1} parent=5 // pred_fallthru
        _
    $region6: #{tpu_custom_call.1} parent=1 // loop_footer
      %s17 = sadd.s32 1, %s13
    $region7: #{tpu_custom_call.1} parent=1 // loop_footer_branch
      %12 = sbr.rel target = $region3
    $region8: #{tpu_custom_call.1} parent=1 // loop_exit
      _
    %1314 = vsyncpa [#allocation3], 1
    %s1315 = scalar_lea.sflag [#allocation3], 1
    %1316 = vsyncpa %s1315, 1

</llo_original>
